<compile_context>
chip_gen: v6e
topology: v6e:2x2x1
jax: 0.10.0
libtpu: 0.0.40
codegen_flags: <defaults>
</compile_context>

<pallas_src>
import jax
import jax.numpy as jnp
from jax.experimental import pallas as pl
from jax.experimental.pallas import tpu as pltpu

C_IN = 1280   # fixed by nn.Linear(1280, 2)
N_CLS = 2


def _round_up(x, m):
    return ((x + m - 1) // m) * m


def _largest_divisor_tile(total, cap, unit):
    """Largest multiple of `unit` that divides `total` and is <= cap.
    Falls back to `total` (a block equal to the full dim is always legal)."""
    if total <= cap:
        return total
    best = 0
    d = unit
    while d <= cap:
        if total % d == 0:
            best = d
        d += unit
    return best if best > 0 else total


def cls_head_kernel(x_ref, w_ref, b_ref, o_ref, acc_ref):
    # x_ref: (TN, TK)   w_ref: (TK, 2)   b_ref: (1, 2)
    # o_ref: (TN, 2)    acc_ref: (TN, 2) f32 scratch (resident across K steps)
    k = pl.program_id(1)

    @pl.when(k == 0)
    def _init():
        acc_ref[...] = jnp.zeros_like(acc_ref)

    # Fused AdaptiveAvgPool2d + Linear: partial matmul over this K tile.
    acc_ref[...] += jnp.dot(x_ref[...], w_ref[...],
                            preferred_element_type=jnp.float32)

    @pl.when(k == pl.num_programs(1) - 1)
    def _finish():
        logits = acc_ref[...] + b_ref[...]                      # (TN, 2)
        # Numerically stable Softmax(dim=1), done once per row tile.
        m = jnp.max(logits, axis=1, keepdims=True)
        e = jnp.exp(logits - m)
        o_ref[...] = (e / jnp.sum(e, axis=1, keepdims=True)).astype(o_ref.dtype)


def cls_head(features, weight, bias, *, row_tile=512, buf_bytes=6 * 1024 * 1024):
    """features: (N, C, H, W) NCHW (PyTorch convention).
    weight: (2, 1280) as in nn.Linear; bias: (2,).  Returns (N, 2) f32 probs."""
    n, c, h, w = features.shape
    assert c == C_IN, f"expected {C_IN} channels, got {c}"
    hw = h * w
    K = c * hw

    # Contiguous NCHW flatten -> free reshape (no HBM round trip).
    x = features.reshape(n, K)
    itemsize = jnp.dtype(x.dtype).itemsize

    # Expanded weight: logits[n,k] = sum_{c,s} x[n, c*HW+s] * W[k,c]/HW + b[k]
    # i.e. each column of W^T repeated HW times, pre-scaled by 1/HW.
    w_exp = jnp.repeat(weight.astype(jnp.float32).T / float(hw), hw, axis=0)  # (K, 2)
    b_t = bias.astype(jnp.float32).reshape(1, N_CLS)

    # ---- row (batch) tiling --------------------------------------------
    if n % 8 == 0:
        tn = _largest_divisor_tile(n, row_tile, 8)
        n_pad = n
    elif n <= row_tile:
        tn = n                      # block dim == full dim is always legal
        n_pad = n
    else:
        # Rare awkward batch size: pad rows up to a sublane multiple.
        n_pad = _round_up(n, 8)
        x = jnp.pad(x, ((0, n_pad - n), (0, 0)))
        tn = _largest_divisor_tile(n_pad, row_tile, 8)

    # ---- K (reduction) tiling -------------------------------------------
    # Multiple of 128 lanes, bounded by the per-buffer VMEM budget and by the
    # lane-padded (TK, 128) weight-tile footprint.  Sweep row_tile/buf_bytes
    # per generation (v5e: smaller / bf16 activations; v6e: larger).
    tk_cap = max(128, min(4096, buf_bytes // max(1, tn * itemsize)))
    tk = _largest_divisor_tile(K, tk_cap, 128)

    grid = (n_pad // tn, K // tk)

    cost = pl.CostEstimate(
        flops=2 * n_pad * K * N_CLS,
        transcendentals=n_pad * N_CLS,
        bytes_accessed=(n_pad * K * itemsize          # activations (dominant)
                        + grid[0] * K * N_CLS * 4     # weight re-read per row tile
                        + N_CLS * 4                   # bias
                        + n_pad * N_CLS * 4),         # output
    )

    out = pl.pallas_call(
        cls_head_kernel,
        out_shape=jax.ShapeDtypeStruct((n_pad, N_CLS), jnp.float32),
        grid=grid,
        in_specs=[
            pl.BlockSpec((tn, tk), lambda i, k: (i, k)),        # activations
            pl.BlockSpec((tk, N_CLS), lambda i, k: (k, 0)),     # expanded weight
            pl.BlockSpec((1, N_CLS), lambda i, k: (0, 0)),      # bias (DMA'd once)
        ],
        out_specs=pl.BlockSpec((tn, N_CLS), lambda i, k: (i, 0)),
        scratch_shapes=[pltpu.VMEM((tn, N_CLS), jnp.float32)],
        compiler_params=pltpu.CompilerParams(
            dimension_semantics=("parallel", "arbitrary"),
            vmem_limit_bytes=32 * 1024 * 1024,
        ),
        cost_estimate=cost,
    )(x, w_exp, b_t)

    return out[:n] if n_pad != n else out


def cls_head_ref(features, weight, bias):
    pooled = jnp.mean(features.astype(jnp.float32), axis=(2, 3))          # (N, C)
    logits = jnp.matmul(pooled, weight.astype(jnp.float32).T,
                        precision=jax.lax.Precision.HIGHEST)
    logits = logits + bias.astype(jnp.float32)
    return jax.nn.softmax(logits, axis=1)


if __name__ == "__main__":
    key = jax.random.PRNGKey(0)
    k_x, k_w, k_b = jax.random.split(key, 3)

    # Small test shapes; channel count is fixed at 1280 by the module.
    N, H, W = 2, 4, 4
    features = jax.random.normal(k_x, (N, C_IN, H, W), dtype=jnp.float32)
    weight = jax.random.normal(k_w, (N_CLS, C_IN), dtype=jnp.float32) * 0.02
    bias = jax.random.normal(k_b, (N_CLS,), dtype=jnp.float32) * 0.02

    out = jax.block_until_ready(cls_head(features, weight, bias))
    ref = cls_head_ref(features, weight, bias)

    assert out.shape == (N, N_CLS)
    assert jnp.allclose(out, ref, atol=1e-4, rtol=1e-4), (out, ref)
    assert jnp.allclose(jnp.sum(out, axis=1), 1.0, atol=1e-5)

    print("KERNEL_OK")
</pallas_src>

<mosaic_0001>
module attributes {stable_mosaic.version = 11 : i64} {
  func.func @cls_head_kernel(%arg0: i32, %arg1: i32, %arg2: memref<2x4096xf32, #tpu.memory_space<vmem>>, %arg3: memref<4096x2xf32, #tpu.memory_space<vmem>>, %arg4: memref<1x2xf32, #tpu.memory_space<vmem>>, %arg5: memref<2x2xf32, #tpu.memory_space<vmem>>, %arg6: memref<2x2xf32, #tpu.memory_space<vmem>>) attributes {dimension_semantics = [#tpu.dimension_semantics<parallel>, #tpu.dimension_semantics<arbitrary>], iteration_bounds = array<i64: 1, 5>, scalar_prefetch = 0 : i64, scratch_operands = 1 : i64, tpu.core_type = #tpu.core_type<tc>, window_params = [{transform_indices = @transform_0, window_bounds = array<i64: 2, 4096>}, {transform_indices = @transform_1, window_bounds = array<i64: 4096, 2>}, {pipeline_mode = #tpu.pipeline_mode<synchronous>, transform_indices = @transform_2, window_bounds = array<i64: 1, 2>}, {transform_indices = @transform_3, window_bounds = array<i64: 2, 2>}]} {
    %c0_i32 = arith.constant 0 : i32
    %0 = arith.cmpi eq, %arg1, %c0_i32 : i32
    %1 = arith.extui %0 : i1 to i32
    %c0_i32_0 = arith.constant 0 : i32
    %2 = arith.cmpi ne, %1, %c0_i32_0 : i32
    scf.if %2 {
      %cst_9 = arith.constant 0.000000e+00 : f32
      %12 = vector.broadcast %cst_9 : f32 to vector<2x2xf32>
      %c0_10 = arith.constant 0 : index
      %c0_11 = arith.constant 0 : index
      %13 = vector.load %arg6[%c0_10, %c0_11] : memref<2x2xf32, #tpu.memory_space<vmem>>, vector<2x2xf32>
      tpu.vector_store %arg6[%c0_10, %c0_11], %12 {strides = array<i32>} : memref<2x2xf32, #tpu.memory_space<vmem>>, vector<2x2xf32>,
    } else {
    }
    %c0 = arith.constant 0 : index
    %c0_1 = arith.constant 0 : index
    %3 = vector.load %arg6[%c0, %c0_1] : memref<2x2xf32, #tpu.memory_space<vmem>>, vector<2x2xf32>
    %c0_2 = arith.constant 0 : index
    %c0_3 = arith.constant 0 : index
    %4 = vector.load %arg2[%c0_2, %c0_3] : memref<2x4096xf32, #tpu.memory_space<vmem>>, vector<2x4096xf32>
    %c0_4 = arith.constant 0 : index
    %c0_5 = arith.constant 0 : index
    %5 = vector.load %arg3[%c0_4, %c0_5] : memref<4096x2xf32, #tpu.memory_space<vmem>>, vector<4096x2xf32>
    %cst = arith.constant dense<0.000000e+00> : vector<2x2xf32>
    %6 = tpu.matmul %4, %5, %cst {dimension_numbers = #tpu.dot_dimension_numbers<[1], [0], [0], [1], [0, 0, 1, 1], [], []>} : vector<2x4096xf32>, vector<4096x2xf32>, vector<2x2xf32> -> vector<2x2xf32>
    %7 = arith.addf %3, %6 : vector<2x2xf32>
    %c0_6 = arith.constant 0 : index
    %c0_7 = arith.constant 0 : index
    %8 = vector.load %arg6[%c0_6, %c0_7] : memref<2x2xf32, #tpu.memory_space<vmem>>, vector<2x2xf32>
    tpu.vector_store %arg6[%c0_6, %c0_7], %7 {strides = array<i32>} : memref<2x2xf32, #tpu.memory_space<vmem>>, vector<2x2xf32>,
    %c4_i32 = arith.constant 4 : i32
    %9 = arith.cmpi eq, %arg1, %c4_i32 : i32
    %10 = arith.extui %9 : i1 to i32
    %c0_i32_8 = arith.constant 0 : i32
    %11 = arith.cmpi ne, %10, %c0_i32_8 : i32
    scf.if %11 {
      %c0_9 = arith.constant 0 : index
      %c0_10 = arith.constant 0 : index
      %12 = vector.load %arg6[%c0_9, %c0_10] : memref<2x2xf32, #tpu.memory_space<vmem>>, vector<2x2xf32>
      %c0_11 = arith.constant 0 : index
      %c0_12 = arith.constant 0 : index
      %13 = vector.load %arg4[%c0_11, %c0_12] : memref<1x2xf32, #tpu.memory_space<vmem>>, vector<1x2xf32>
      %14 = vector.broadcast %13 : vector<1x2xf32> to vector<2x2xf32>
      %15 = arith.addf %12, %14 : vector<2x2xf32>
      %cst_13 = arith.constant dense<0xFF800000> : vector<2xf32>
      %16 = vector.multi_reduction <maximumf>, %15, %cst_13 [1] : vector<2x2xf32> to vector<2xf32>
      %17 = vector.shape_cast %16 : vector<2xf32> to vector<2x1xf32>
      %18 = vector.broadcast %17 : vector<2x1xf32> to vector<2x2xf32>
      %19 = arith.subf %15, %18 : vector<2x2xf32>
      %20 = math.exp %19 : vector<2x2xf32>
      %cst_14 = arith.constant dense<0.000000e+00> : vector<2xf32>
      %21 = vector.multi_reduction <add>, %20, %cst_14 [1] : vector<2x2xf32> to vector<2xf32>
      %22 = vector.shape_cast %21 : vector<2xf32> to vector<2x1xf32>
      %23 = vector.broadcast %22 : vector<2x1xf32> to vector<2x2xf32>
      %24 = arith.divf %20, %23 : vector<2x2xf32>
      %c0_15 = arith.constant 0 : index
      %c0_16 = arith.constant 0 : index
      %25 = vector.load %arg5[%c0_15, %c0_16] : memref<2x2xf32, #tpu.memory_space<vmem>>, vector<2x2xf32>
      tpu.vector_store %arg5[%c0_15, %c0_16], %24 {strides = array<i32>} : memref<2x2xf32, #tpu.memory_space<vmem>>, vector<2x2xf32>,
    } else {
    }
    return
  }
  func.func @transform_0(%arg0: i32, %arg1: i32) -> (i32, i32) {
    %c0_i32 = arith.constant 0 : i32
    return %arg0, %arg1 : i32, i32
  }
  func.func @transform_1(%arg0: i32, %arg1: i32) -> (i32, i32) {
    %c0_i32 = arith.constant 0 : i32
    %c0_i32_0 = arith.constant 0 : i32
    return %arg1, %c0_i32 : i32, i32
  }
  func.func @transform_2(%arg0: i32, %arg1: i32) -> (i32, i32) {
    %c0_i32 = arith.constant 0 : i32
    %c0_i32_0 = arith.constant 0 : i32
    %c0_i32_1 = arith.constant 0 : i32
    return %c0_i32, %c0_i32_0 : i32, i32
  }
  func.func @transform_3(%arg0: i32, %arg1: i32) -> (i32, i32) {
    %c0_i32 = arith.constant 0 : i32
    %c0_i32_0 = arith.constant 0 : i32
    return %arg0, %c0_i32 : i32, i32
  }
}

</mosaic_0001>

<llo_original>
// kernel: tpu_custom_call.1
$region0: #{tpu_custom_call.1}
  #allocation0 [shape = 'u32[]', space=smem, size = 0x4, offset = 0x4, fixed_abs, tag = 'smem constant byte address 0x4 - core index']
  #allocation1 [shape = 'u32[144,128]{1,0:T(1,128)}', space=vmem, size = 0x12000, scoped, tag = 'internal scratch']
  #allocation2 [shape = 'f32[2,2]{1,0:T(2,128)}', space=vmem, size = 0x400, scoped, tag = 'scratch operand']
  %s0 = inlined_call_operand.vmem [shape: f32[2,20480], index: 0, kind: input, shape index: {}]
  %s1 = inlined_call_operand.vmem [shape: f32[20480,2], index: 1, kind: input, shape index: {}]
  %s2 = inlined_call_operand.vmem [shape: f32[1,2], index: 2, kind: input, shape index: {}]
  %s3 = inlined_call_operand.hbm [shape: f32[2,2], index: 3, kind: output, shape index: {}]
  %s4 = sld [smem:[#allocation0]]
  $region53: #{tpu_custom_call.1} parent=0
    _
  %s6 = ssub.s32 1, %s4
  %s7 = scalar_select 0, %s6, %s4
  $region1: #{tpu_custom_call.1} parent=0
    #allocation3 [shape = 'u8[1024]{0}', space=vmem, size = 0x400, scoped, tag = 'output window, operand 0, single buffered']
    #allocation4 [shape = 's32[2]{0}', space=sflag, size = 0x8, scoped, tag = 'scoped memory for tpu_custom_call.1']
    %8 = vsyncpa [#allocation4], 0
    loop: start=0, step=1, limit=7
    $region2: #{tpu_custom_call.1} parent=1 // loop_pre_header
      _
    $region3: #{tpu_custom_call.1} parent=1 // loop_header
      %s10 = sphi 0, %s14
      %p11 = scmp.ge.s32.totalorder %s10, 7
      %s17 = sphi 0, %s29
      %s18 = sphi 0, %s25
      %s19 = sphi 0, %s17
      %s20 = sphi 0, %s18
      %s21 = sphi 0, %s19
      %s22 = sphi 0, %s20
      %s34 = sphi 0, %s36
      %s37 = sphi 0, %s34
      %s38 = sphi 0, %s37
      %s54 = sphi 0, %s38
      %s60 = sphi 0, %s62
      %s63 = sphi 0, %s60
      %s64 = sphi 0, %s63
      %s80 = sphi 0, %s64
      %s84 = sphi 0, %s84
      %s86 = sphi 0, %s84
      %s87 = sphi 0, %s86
      %s101 = sphi 0, %s87
      %s107 = sphi 0, %s109
      %s110 = sphi 0, %s107
      %s111 = sphi 0, %s110
      %s127 = sphi 0, %s111
    $region4: #{tpu_custom_call.1} parent=1 // loop_header_branch
      %13 = sbr.rel (%p11) target = $region8
    $region5: #{tpu_custom_call.1} parent=1 // loop_body
      %s15 = ssub.s32 %s10, 1
      %s16 = ssub.s32 %s10, 2
      %s23 = sadd.s32 1, %s18
      %p24 = scmp.ge.s32.totalorder %s23, 5
      %s25 = scalar_select %p24, 0, %s23
      %s26 = sadd.s32 1, %s17
      %s27 = scalar_select %p24, %s26, %s17
      %p28 = scmp.ge.s32.totalorder %s27, 1
      %s29 = scalar_select %p28, 0, %s27
      %s30 = ssub.s32 %s17, %s29
      %s31 = ssub.s32 %s18, %s25
      %s32 = sor.u32 %s30, %s31
      %p33 = scmp.eq.s32.totalorder %s32, 0
      %s35 = sadd.s32 %s34, 1
      %s36 = scalar_select %p33, %s34, %s35
      %p39 = pneg %p33
      %p40 = scmp.eq.s32.totalorder %s10, 4
      %p41 = por %p39, %p40
      %p42 = scmp.ne.s32.totalorder %s34, %s37
      %p43 = scmp.eq.s32.totalorder %s10, 0
      %p44 = por %p42, %p43
      %p45 = scmp.ne.s32.totalorder %s34, %s37
      %p46 = scmp.eq.s32.totalorder %s15, 4
      %p47 = por %p45, %p46
      %p48 = scmp.ne.s32.totalorder %s37, %s38
      %p49 = scmp.eq.s32.totalorder %s15, 0
      %p50 = por %p48, %p49
      %p51 = scmp.ne.s32.totalorder %s37, %s38
      %p52 = scmp.eq.s32.totalorder %s16, 4
      %p53 = por %p51, %p52
      %p55 = scmp.ne.s32.totalorder %s38, %s54
      %p56 = scmp.eq.s32.totalorder %s16, 0
      %p57 = por %p55, %p56
      %s58 = ssub.s32 %s18, %s25
      %p59 = scmp.eq.s32.totalorder %s58, 0
      %s61 = sadd.s32 %s60, 1
      %s62 = scalar_select %p59, %s60, %s61
      %p65 = pneg %p59
      %p66 = scmp.eq.s32.totalorder %s10, 4
      %p67 = por %p65, %p66
      %p68 = scmp.ne.s32.totalorder %s60, %s63
      %p69 = scmp.eq.s32.totalorder %s10, 0
      %p70 = por %p68, %p69
      %p71 = scmp.ne.s32.totalorder %s60, %s63
      %p72 = scmp.eq.s32.totalorder %s15, 4
      %p73 = por %p71, %p72
      %p74 = scmp.ne.s32.totalorder %s63, %s64
      %p75 = scmp.eq.s32.totalorder %s15, 0
      %p76 = por %p74, %p75
      %p77 = scmp.ne.s32.totalorder %s63, %s64
      %p78 = scmp.eq.s32.totalorder %s16, 4
      %p79 = por %p77, %p78
      %p81 = scmp.ne.s32.totalorder %s64, %s80
      %p82 = scmp.eq.s32.totalorder %s16, 0
      %p83 = por %p81, %p82
      %s85 = sadd.s32 %s84, 1
      %p88 = scmp.eq.s32.totalorder %s10, 4
      %p89 = scmp.ne.s32.totalorder %s84, %s86
      %p90 = scmp.eq.s32.totalorder %s10, 0
      %p91 = por %p89, %p90
      %p92 = scmp.ne.s32.totalorder %s84, %s86
      %p93 = scmp.eq.s32.totalorder %s15, 4
      %p94 = por %p92, %p93
      %p95 = scmp.ne.s32.totalorder %s86, %s87
      %p96 = scmp.eq.s32.totalorder %s15, 0
      %p97 = por %p95, %p96
      %p98 = scmp.ne.s32.totalorder %s86, %s87
      %p99 = scmp.eq.s32.totalorder %s16, 4
      %p100 = por %p98, %p99
      %p102 = scmp.ne.s32.totalorder %s87, %s101
      %p103 = scmp.eq.s32.totalorder %s16, 0
      %p104 = por %p102, %p103
      %s105 = ssub.s32 %s17, %s29
      %p106 = scmp.eq.s32.totalorder %s105, 0
      %s108 = sadd.s32 %s107, 1
      %s109 = scalar_select %p106, %s107, %s108
      %p112 = pneg %p106
      %p113 = scmp.eq.s32.totalorder %s10, 4
      %p114 = por %p112, %p113
      %p115 = scmp.ne.s32.totalorder %s107, %s110
      %p116 = scmp.eq.s32.totalorder %s10, 0
      %p117 = por %p115, %p116
      %p118 = scmp.ne.s32.totalorder %s107, %s110
      %p119 = scmp.eq.s32.totalorder %s15, 4
      %p120 = por %p118, %p119
      %p121 = scmp.ne.s32.totalorder %s110, %s111
      %p122 = scmp.eq.s32.totalorder %s15, 0
      %p123 = por %p121, %p122
      %p124 = scmp.ne.s32.totalorder %s110, %s111
      %p125 = scmp.eq.s32.totalorder %s16, 4
      %p126 = por %p124, %p125
      %p128 = scmp.ne.s32.totalorder %s111, %s127
      %p129 = scmp.eq.s32.totalorder %s16, 0
      %p130 = por %p128, %p129
      %p131 = scmp.le.s32.totalorder 1, %s10
      %p132 = scmp.lt.s32.totalorder %s10, 6
      %p133 = pnand %p131, %p132
      %p134 = pneg %p133
      // Predicated region
      $region9: #{tpu_custom_call.1} parent=5 // pred_check
        _
      $region10: #{tpu_custom_call.1} parent=5 // pred_check_branch
        %136 = sbr.rel (%p133) target = $region12
      $region11: #{tpu_custom_call.1} parent=5 // pred_region
        %s137 = ssub.s32 %s10, 1
        // Predicated region
        $region13: #{tpu_custom_call.1} parent=11 // pred_check
          %p138 = pneg %p97
        $region14: #{tpu_custom_call.1} parent=11 // pred_check_branch
          %140 = sbr.rel (%p138) target = $region16
        $region15: #{tpu_custom_call.1} parent=11 // pred_region
          _
        $region16: #{tpu_custom_call.1} parent=11 // pred_fallthru
          _
      $region12: #{tpu_custom_call.1} parent=5 // pred_fallthru
        _
      %p141 = scmp.lt.s32.totalorder %s10, 5
      // Predicated region
      $region17: #{tpu_custom_call.1} parent=5 // pred_check
        %p142 = pneg %p141
      $region18: #{tpu_custom_call.1} parent=5 // pred_check_branch
        %144 = sbr.rel (%p142) target = $region20
      $region19: #{tpu_custom_call.1} parent=5 // pred_region
        // Predicated region
        $region21: #{tpu_custom_call.1} parent=19 // pred_check
          %p145 = pneg %p44
        $region22: #{tpu_custom_call.1} parent=19 // pred_check_branch
          %147 = sbr.rel (%p145) target = $region24
        $region23: #{tpu_custom_call.1} parent=19 // pred_region
          %s148 = smul.u32 32, %s18
          %p149 = scmp.lt.s32.totalorder %s17, 0
          %s150 = scalar_select %p149, %s17, 0
          %p151 = scmp.lt.s32.totalorder %s148, 159
          %s152 = scalar_select %p151, %s148, 159
          %s153 = smul.addr %s150, 160
          %s154 = sadd.s32 %s152, %s153
          %s155 = smul.addr %s154, 2
          %s156 = scalar_lea.vmem %s0, %s155
          %s157 = smul.u32 32, %s18
        $region24: #{tpu_custom_call.1} parent=19 // pred_fallthru
          _
        // Predicated region
        $region25: #{tpu_custom_call.1} parent=19 // pred_check
          %p158 = pneg %p70
        $region26: #{tpu_custom_call.1} parent=19 // pred_check_branch
          %160 = sbr.rel (%p158) target = $region28
        $region27: #{tpu_custom_call.1} parent=19 // pred_region
          %s161 = smul.u32 512, %s18
          %p162 = scmp.lt.s32.totalorder %s161, 2559
          %s163 = scalar_select %p162, %s161, 2559
          %s164 = smul.addr %s163, 8
          %s165 = scalar_lea.vmem %s1, %s164
          %s166 = smul.u32 512, %s18
        $region28: #{tpu_custom_call.1} parent=19 // pred_fallthru
          _
      $region20: #{tpu_custom_call.1} parent=5 // pred_fallthru
        _
      %p167 = scmp.le.s32.totalorder 1, %s10
      %p168 = scmp.lt.s32.totalorder %s10, 6
      %p169 = pnand %p167, %p168
      %p170 = pneg %p169
      // Predicated region
      $region29: #{tpu_custom_call.1} parent=5 // pred_check
        _
      $region30: #{tpu_custom_call.1} parent=5 // pred_check_branch
        %172 = sbr.rel (%p169) target = $region32
      $region31: #{tpu_custom_call.1} parent=5 // pred_region
        %s173 = ssub.s32 %s10, 1
        %s174 = smul.u32 32, %s20
        %p175 = scmp.lt.s32.totalorder %s19, 0
        %s176 = scalar_select %p175, %s19, 0
        %p177 = scmp.lt.s32.totalorder %s174, 159
        %s178 = scalar_select %p177, %s174, 159
        %s179 = smul.addr %s176, 160
        %s180 = sadd.s32 %s178, %s179
        %s181 = smul.addr %s180, 2
        %s182 = scalar_lea.vmem %s0, %s181
        %p183 = pneg %p50
        %p184 = pneg %p47
        %s185 = smul.u32 512, %s20
        %p186 = scmp.lt.s32.totalorder %s185, 2559
        %s187 = scalar_select %p186, %s185, 2559
        %s188 = smul.addr %s187, 8
        %s189 = scalar_lea.vmem %s1, %s188
        %p190 = pneg %p76
        %p191 = pneg %p73
        %p192 = pneg %p97
        %p193 = pneg %p94
        %p194 = pneg %p123
        %p195 = pneg %p120
        %s196 = smul.u32 32, %s20
        %p197 = scmp.lt.s32.totalorder %s19, 0
        %s198 = scalar_select %p197, %s19, 0
        %p199 = scmp.lt.s32.totalorder %s196, 159
        %s200 = scalar_select %p199, %s196, 159
        %s201 = smul.addr %s198, 160
        %s202 = sadd.s32 %s200, %s201
        %s203 = smul.addr %s202, 2
        %s204 = scalar_lea.vmem %s0, %s203
        %s205 = smul.u32 32, %s20
        %s206 = smul.u32 512, %s20
        %p207 = scmp.lt.s32.totalorder %s206, 2559
        %s208 = scalar_select %p207, %s206, 2559
        %s209 = smul.addr %s208, 8
        %s210 = scalar_lea.vmem %s1, %s209
        %s211 = smul.u32 512, %s20
        %p212 = scmp.eq.s32.totalorder %s20, 0
        // Predicated region
        $region33: #{tpu_custom_call.1} parent=31 // pred_check
          %p213 = pneg %p212
        $region34: #{tpu_custom_call.1} parent=31 // pred_check_branch
          %215 = sbr.rel (%p213) target = $region36
        $region35: #{tpu_custom_call.1} parent=31 // pred_region
          %vm216 = vcmask 9216
          %217 = vst.msk [vmem:[#allocation2] sm:$0x3] %vm216, 0.0
        $region36: #{tpu_custom_call.1} parent=31 // pred_fallthru
          _
        %v218 = vld [vmem:[#allocation2] sm:$0x3]
        %v219 = vld [vmem:[%s204] sm:$0xff]
        %v220 = vld [vmem:[%s204 + $0x8] sm:$0xff]
        %v221 = vld [vmem:[%s204 + $0x10] sm:$0xff]
        %v222 = vld [vmem:[%s204 + $0x18] sm:$0xff]
        %v223 = vld [vmem:[%s204 + $0x20] sm:$0xff]
        %v224 = vld [vmem:[%s204 + $0x28] sm:$0xff]
        %v225 = vld [vmem:[%s204 + $0x30] sm:$0xff]
        %v226 = vld [vmem:[%s204 + $0x38] sm:$0xff]
        %v227 = vld [vmem:[%s210] sm:$0xff]
        %v228 = vld [vmem:[%s210 + $0x8] sm:$0xff]
        %v229 = vld [vmem:[%s210 + $0x10] sm:$0xff]
        %v230 = vld [vmem:[%s210 + $0x18] sm:$0xff]
        %v231 = vld [vmem:[%s210 + $0x20] sm:$0xff]
        %v232 = vld [vmem:[%s210 + $0x28] sm:$0xff]
        %v233 = vld [vmem:[%s210 + $0x30] sm:$0xff]
        %v234 = vld [vmem:[%s210 + $0x38] sm:$0xff]
        %v235 = vld [vmem:[%s210 + $0x40] sm:$0xff]
        %v236 = vld [vmem:[%s210 + $0x48] sm:$0xff]
        %v237 = vld [vmem:[%s210 + $0x50] sm:$0xff]
        %v238 = vld [vmem:[%s210 + $0x58] sm:$0xff]
        %v239 = vld [vmem:[%s210 + $0x60] sm:$0xff]
        %v240 = vld [vmem:[%s210 + $0x68] sm:$0xff]
        %v241 = vld [vmem:[%s210 + $0x70] sm:$0xff]
        %v242 = vld [vmem:[%s210 + $0x78] sm:$0xff]
        %v243 = vld [vmem:[%s210 + $0x80] sm:$0xff]
        %v244 = vld [vmem:[%s210 + $0x88] sm:$0xff]
        %v245 = vld [vmem:[%s210 + $0x90] sm:$0xff]
        %v246 = vld [vmem:[%s210 + $0x98] sm:$0xff]
        %v247 = vld [vmem:[%s210 + $0xa0] sm:$0xff]
        %v248 = vld [vmem:[%s210 + $0xa8] sm:$0xff]
        %v249 = vld [vmem:[%s210 + $0xb0] sm:$0xff]
        %v250 = vld [vmem:[%s210 + $0xb8] sm:$0xff]
        %v251 = vld [vmem:[%s210 + $0xc0] sm:$0xff]
        %v252 = vld [vmem:[%s210 + $0xc8] sm:$0xff]
        %v253 = vld [vmem:[%s210 + $0xd0] sm:$0xff]
        %v254 = vld [vmem:[%s210 + $0xd8] sm:$0xff]
        %v255 = vld [vmem:[%s210 + $0xe0] sm:$0xff]
        %v256 = vld [vmem:[%s210 + $0xe8] sm:$0xff]
        %v257 = vld [vmem:[%s210 + $0xf0] sm:$0xff]
        %v258 = vld [vmem:[%s210 + $0xf8] sm:$0xff]
        %v259 = vld [vmem:[%s210 + $0x100] sm:$0xff]
        %v260 = vld [vmem:[%s210 + $0x108] sm:$0xff]
        %v261 = vld [vmem:[%s210 + $0x110] sm:$0xff]
        %v262 = vld [vmem:[%s210 + $0x118] sm:$0xff]
        %v263 = vld [vmem:[%s210 + $0x120] sm:$0xff]
        %v264 = vld [vmem:[%s210 + $0x128] sm:$0xff]
        %v265 = vld [vmem:[%s210 + $0x130] sm:$0xff]
        %v266 = vld [vmem:[%s210 + $0x138] sm:$0xff]
        %v267 = vld [vmem:[%s210 + $0x140] sm:$0xff]
        %v268 = vld [vmem:[%s210 + $0x148] sm:$0xff]
        %v269 = vld [vmem:[%s210 + $0x150] sm:$0xff]
        %v270 = vld [vmem:[%s210 + $0x158] sm:$0xff]
        %v271 = vld [vmem:[%s210 + $0x160] sm:$0xff]
        %v272 = vld [vmem:[%s210 + $0x168] sm:$0xff]
        %v273 = vld [vmem:[%s210 + $0x170] sm:$0xff]
        %v274 = vld [vmem:[%s210 + $0x178] sm:$0xff]
        %v275 = vld [vmem:[%s210 + $0x180] sm:$0xff]
        %v276 = vld [vmem:[%s210 + $0x188] sm:$0xff]
        %v277 = vld [vmem:[%s210 + $0x190] sm:$0xff]
        %v278 = vld [vmem:[%s210 + $0x198] sm:$0xff]
        %v279 = vld [vmem:[%s210 + $0x1a0] sm:$0xff]
        %v280 = vld [vmem:[%s210 + $0x1a8] sm:$0xff]
        %v281 = vld [vmem:[%s210 + $0x1b0] sm:$0xff]
        %v282 = vld [vmem:[%s210 + $0x1b8] sm:$0xff]
        %v283 = vld [vmem:[%s210 + $0x1c0] sm:$0xff]
        %v284 = vld [vmem:[%s210 + $0x1c8] sm:$0xff]
        %v285 = vld [vmem:[%s210 + $0x1d0] sm:$0xff]
        %v286 = vld [vmem:[%s210 + $0x1d8] sm:$0xff]
        %v287 = vld [vmem:[%s210 + $0x1e0] sm:$0xff]
        %v288 = vld [vmem:[%s210 + $0x1e8] sm:$0xff]
        %v289 = vld [vmem:[%s210 + $0x1f0] sm:$0xff]
        %v290 = vld [vmem:[%s210 + $0x1f8] sm:$0xff]
        %v291 = vld [vmem:[%s210 + $0x200] sm:$0xff]
        %v292 = vld [vmem:[%s210 + $0x208] sm:$0xff]
        %v293 = vld [vmem:[%s210 + $0x210] sm:$0xff]
        %v294 = vld [vmem:[%s210 + $0x218] sm:$0xff]
        %v295 = vld [vmem:[%s210 + $0x220] sm:$0xff]
        %v296 = vld [vmem:[%s210 + $0x228] sm:$0xff]
        %v297 = vld [vmem:[%s210 + $0x230] sm:$0xff]
        %v298 = vld [vmem:[%s210 + $0x238] sm:$0xff]
        %v299 = vld [vmem:[%s210 + $0x240] sm:$0xff]
        %v300 = vld [vmem:[%s210 + $0x248] sm:$0xff]
        %v301 = vld [vmem:[%s210 + $0x250] sm:$0xff]
        %v302 = vld [vmem:[%s210 + $0x258] sm:$0xff]
        %v303 = vld [vmem:[%s210 + $0x260] sm:$0xff]
        %v304 = vld [vmem:[%s210 + $0x268] sm:$0xff]
        %v305 = vld [vmem:[%s210 + $0x270] sm:$0xff]
        %v306 = vld [vmem:[%s210 + $0x278] sm:$0xff]
        %v307 = vld [vmem:[%s210 + $0x280] sm:$0xff]
        %v308 = vld [vmem:[%s210 + $0x288] sm:$0xff]
        %v309 = vld [vmem:[%s210 + $0x290] sm:$0xff]
        %v310 = vld [vmem:[%s210 + $0x298] sm:$0xff]
        %v311 = vld [vmem:[%s210 + $0x2a0] sm:$0xff]
        %v312 = vld [vmem:[%s210 + $0x2a8] sm:$0xff]
        %v313 = vld [vmem:[%s210 + $0x2b0] sm:$0xff]
        %v314 = vld [vmem:[%s210 + $0x2b8] sm:$0xff]
        %v315 = vld [vmem:[%s210 + $0x2c0] sm:$0xff]
        %v316 = vld [vmem:[%s210 + $0x2c8] sm:$0xff]
        %v317 = vld [vmem:[%s210 + $0x2d0] sm:$0xff]
        %v318 = vld [vmem:[%s210 + $0x2d8] sm:$0xff]
        %v319 = vld [vmem:[%s210 + $0x2e0] sm:$0xff]
        %v320 = vld [vmem:[%s210 + $0x2e8] sm:$0xff]
        %v321 = vld [vmem:[%s210 + $0x2f0] sm:$0xff]
        %v322 = vld [vmem:[%s210 + $0x2f8] sm:$0xff]
        %v323 = vld [vmem:[%s210 + $0x300] sm:$0xff]
        %v324 = vld [vmem:[%s210 + $0x308] sm:$0xff]
        %v325 = vld [vmem:[%s210 + $0x310] sm:$0xff]
        %v326 = vld [vmem:[%s210 + $0x318] sm:$0xff]
        %v327 = vld [vmem:[%s210 + $0x320] sm:$0xff]
        %v328 = vld [vmem:[%s210 + $0x328] sm:$0xff]
        %v329 = vld [vmem:[%s210 + $0x330] sm:$0xff]
        %v330 = vld [vmem:[%s210 + $0x338] sm:$0xff]
        %v331 = vld [vmem:[%s210 + $0x340] sm:$0xff]
        %v332 = vld [vmem:[%s210 + $0x348] sm:$0xff]
        %v333 = vld [vmem:[%s210 + $0x350] sm:$0xff]
        %v334 = vld [vmem:[%s210 + $0x358] sm:$0xff]
        %v335 = vld [vmem:[%s210 + $0x360] sm:$0xff]
        %v336 = vld [vmem:[%s210 + $0x368] sm:$0xff]
        %v337 = vld [vmem:[%s210 + $0x370] sm:$0xff]
        %v338 = vld [vmem:[%s210 + $0x378] sm:$0xff]
        %v339 = vld [vmem:[%s210 + $0x380] sm:$0xff]
        %v340 = vld [vmem:[%s210 + $0x388] sm:$0xff]
        %v341 = vld [vmem:[%s210 + $0x390] sm:$0xff]
        %v342 = vld [vmem:[%s210 + $0x398] sm:$0xff]
        %v343 = vld [vmem:[%s210 + $0x3a0] sm:$0xff]
        %v344 = vld [vmem:[%s210 + $0x3a8] sm:$0xff]
        %v345 = vld [vmem:[%s210 + $0x3b0] sm:$0xff]
        %v346 = vld [vmem:[%s210 + $0x3b8] sm:$0xff]
        %v347 = vld [vmem:[%s210 + $0x3c0] sm:$0xff]
        %v348 = vld [vmem:[%s210 + $0x3c8] sm:$0xff]
        %v349 = vld [vmem:[%s210 + $0x3d0] sm:$0xff]
        %v350 = vld [vmem:[%s210 + $0x3d8] sm:$0xff]
        %v351 = vld [vmem:[%s210 + $0x3e0] sm:$0xff]
        %v352 = vld [vmem:[%s210 + $0x3e8] sm:$0xff]
        %v353 = vld [vmem:[%s210 + $0x3f0] sm:$0xff]
        %v354 = vld [vmem:[%s210 + $0x3f8] sm:$0xff]
        %v355 = vld [vmem:[%s210 + $0x400] sm:$0xff]
        %v356 = vld [vmem:[%s210 + $0x408] sm:$0xff]
        %v357 = vld [vmem:[%s210 + $0x410] sm:$0xff]
        %v358 = vld [vmem:[%s210 + $0x418] sm:$0xff]
        %v359 = vld [vmem:[%s210 + $0x420] sm:$0xff]
        %v360 = vld [vmem:[%s210 + $0x428] sm:$0xff]
        %v361 = vld [vmem:[%s210 + $0x430] sm:$0xff]
        %v362 = vld [vmem:[%s210 + $0x438] sm:$0xff]
        %v363 = vld [vmem:[%s210 + $0x440] sm:$0xff]
        %v364 = vld [vmem:[%s210 + $0x448] sm:$0xff]
        %v365 = vld [vmem:[%s210 + $0x450] sm:$0xff]
        %v366 = vld [vmem:[%s210 + $0x458] sm:$0xff]
        %v367 = vld [vmem:[%s210 + $0x460] sm:$0xff]
        %v368 = vld [vmem:[%s210 + $0x468] sm:$0xff]
        %v369 = vld [vmem:[%s210 + $0x470] sm:$0xff]
        %v370 = vld [vmem:[%s210 + $0x478] sm:$0xff]
        %v371 = vld [vmem:[%s210 + $0x480] sm:$0xff]
        %v372 = vld [vmem:[%s210 + $0x488] sm:$0xff]
        %v373 = vld [vmem:[%s210 + $0x490] sm:$0xff]
        %v374 = vld [vmem:[%s210 + $0x498] sm:$0xff]
        %v375 = vld [vmem:[%s210 + $0x4a0] sm:$0xff]
        %v376 = vld [vmem:[%s210 + $0x4a8] sm:$0xff]
        %v377 = vld [vmem:[%s210 + $0x4b0] sm:$0xff]
        %v378 = vld [vmem:[%s210 + $0x4b8] sm:$0xff]
        %v379 = vld [vmem:[%s210 + $0x4c0] sm:$0xff]
        %v380 = vld [vmem:[%s210 + $0x4c8] sm:$0xff]
        %v381 = vld [vmem:[%s210 + $0x4d0] sm:$0xff]
        %v382 = vld [vmem:[%s210 + $0x4d8] sm:$0xff]
        %v383 = vld [vmem:[%s210 + $0x4e0] sm:$0xff]
        %v384 = vld [vmem:[%s210 + $0x4e8] sm:$0xff]
        %v385 = vld [vmem:[%s210 + $0x4f0] sm:$0xff]
        %v386 = vld [vmem:[%s210 + $0x4f8] sm:$0xff]
        %v387 = vld [vmem:[%s210 + $0x500] sm:$0xff]
        %v388 = vld [vmem:[%s210 + $0x508] sm:$0xff]
        %v389 = vld [vmem:[%s210 + $0x510] sm:$0xff]
        %v390 = vld [vmem:[%s210 + $0x518] sm:$0xff]
        %v391 = vld [vmem:[%s210 + $0x520] sm:$0xff]
        %v392 = vld [vmem:[%s210 + $0x528] sm:$0xff]
        %v393 = vld [vmem:[%s210 + $0x530] sm:$0xff]
        %v394 = vld [vmem:[%s210 + $0x538] sm:$0xff]
        %v395 = vld [vmem:[%s210 + $0x540] sm:$0xff]
        %v396 = vld [vmem:[%s210 + $0x548] sm:$0xff]
        %v397 = vld [vmem:[%s210 + $0x550] sm:$0xff]
        %v398 = vld [vmem:[%s210 + $0x558] sm:$0xff]
        %v399 = vld [vmem:[%s210 + $0x560] sm:$0xff]
        %v400 = vld [vmem:[%s210 + $0x568] sm:$0xff]
        %v401 = vld [vmem:[%s210 + $0x570] sm:$0xff]
        %v402 = vld [vmem:[%s210 + $0x578] sm:$0xff]
        %v403 = vld [vmem:[%s210 + $0x580] sm:$0xff]
        %v404 = vld [vmem:[%s210 + $0x588] sm:$0xff]
        %v405 = vld [vmem:[%s210 + $0x590] sm:$0xff]
        %v406 = vld [vmem:[%s210 + $0x598] sm:$0xff]
        %v407 = vld [vmem:[%s210 + $0x5a0] sm:$0xff]
        %v408 = vld [vmem:[%s210 + $0x5a8] sm:$0xff]
        %v409 = vld [vmem:[%s210 + $0x5b0] sm:$0xff]
        %v410 = vld [vmem:[%s210 + $0x5b8] sm:$0xff]
        %v411 = vld [vmem:[%s210 + $0x5c0] sm:$0xff]
        %v412 = vld [vmem:[%s210 + $0x5c8] sm:$0xff]
        %v413 = vld [vmem:[%s210 + $0x5d0] sm:$0xff]
        %v414 = vld [vmem:[%s210 + $0x5d8] sm:$0xff]
        %v415 = vld [vmem:[%s210 + $0x5e0] sm:$0xff]
        %v416 = vld [vmem:[%s210 + $0x5e8] sm:$0xff]
        %v417 = vld [vmem:[%s210 + $0x5f0] sm:$0xff]
        %v418 = vld [vmem:[%s210 + $0x5f8] sm:$0xff]
        %v419 = vld [vmem:[%s210 + $0x600] sm:$0xff]
        %v420 = vld [vmem:[%s210 + $0x608] sm:$0xff]
        %v421 = vld [vmem:[%s210 + $0x610] sm:$0xff]
        %v422 = vld [vmem:[%s210 + $0x618] sm:$0xff]
        %v423 = vld [vmem:[%s210 + $0x620] sm:$0xff]
        %v424 = vld [vmem:[%s210 + $0x628] sm:$0xff]
        %v425 = vld [vmem:[%s210 + $0x630] sm:$0xff]
        %v426 = vld [vmem:[%s210 + $0x638] sm:$0xff]
        %v427 = vld [vmem:[%s210 + $0x640] sm:$0xff]
        %v428 = vld [vmem:[%s210 + $0x648] sm:$0xff]
        %v429 = vld [vmem:[%s210 + $0x650] sm:$0xff]
        %v430 = vld [vmem:[%s210 + $0x658] sm:$0xff]
        %v431 = vld [vmem:[%s210 + $0x660] sm:$0xff]
        %v432 = vld [vmem:[%s210 + $0x668] sm:$0xff]
        %v433 = vld [vmem:[%s210 + $0x670] sm:$0xff]
        %v434 = vld [vmem:[%s210 + $0x678] sm:$0xff]
        %v435 = vld [vmem:[%s210 + $0x680] sm:$0xff]
        %v436 = vld [vmem:[%s210 + $0x688] sm:$0xff]
        %v437 = vld [vmem:[%s210 + $0x690] sm:$0xff]
        %v438 = vld [vmem:[%s210 + $0x698] sm:$0xff]
        %v439 = vld [vmem:[%s210 + $0x6a0] sm:$0xff]
        %v440 = vld [vmem:[%s210 + $0x6a8] sm:$0xff]
        %v441 = vld [vmem:[%s210 + $0x6b0] sm:$0xff]
        %v442 = vld [vmem:[%s210 + $0x6b8] sm:$0xff]
        %v443 = vld [vmem:[%s210 + $0x6c0] sm:$0xff]
        %v444 = vld [vmem:[%s210 + $0x6c8] sm:$0xff]
        %v445 = vld [vmem:[%s210 + $0x6d0] sm:$0xff]
        %v446 = vld [vmem:[%s210 + $0x6d8] sm:$0xff]
        %v447 = vld [vmem:[%s210 + $0x6e0] sm:$0xff]
        %v448 = vld [vmem:[%s210 + $0x6e8] sm:$0xff]
        %v449 = vld [vmem:[%s210 + $0x6f0] sm:$0xff]
        %v450 = vld [vmem:[%s210 + $0x6f8] sm:$0xff]
        %v451 = vld [vmem:[%s210 + $0x700] sm:$0xff]
        %v452 = vld [vmem:[%s210 + $0x708] sm:$0xff]
        %v453 = vld [vmem:[%s210 + $0x710] sm:$0xff]
        %v454 = vld [vmem:[%s210 + $0x718] sm:$0xff]
        %v455 = vld [vmem:[%s210 + $0x720] sm:$0xff]
        %v456 = vld [vmem:[%s210 + $0x728] sm:$0xff]
        %v457 = vld [vmem:[%s210 + $0x730] sm:$0xff]
        %v458 = vld [vmem:[%s210 + $0x738] sm:$0xff]
        %v459 = vld [vmem:[%s210 + $0x740] sm:$0xff]
        %v460 = vld [vmem:[%s210 + $0x748] sm:$0xff]
        %v461 = vld [vmem:[%s210 + $0x750] sm:$0xff]
        %v462 = vld [vmem:[%s210 + $0x758] sm:$0xff]
        %v463 = vld [vmem:[%s210 + $0x760] sm:$0xff]
        %v464 = vld [vmem:[%s210 + $0x768] sm:$0xff]
        %v465 = vld [vmem:[%s210 + $0x770] sm:$0xff]
        %v466 = vld [vmem:[%s210 + $0x778] sm:$0xff]
        %v467 = vld [vmem:[%s210 + $0x780] sm:$0xff]
        %v468 = vld [vmem:[%s210 + $0x788] sm:$0xff]
        %v469 = vld [vmem:[%s210 + $0x790] sm:$0xff]
        %v470 = vld [vmem:[%s210 + $0x798] sm:$0xff]
        %v471 = vld [vmem:[%s210 + $0x7a0] sm:$0xff]
        %v472 = vld [vmem:[%s210 + $0x7a8] sm:$0xff]
        %v473 = vld [vmem:[%s210 + $0x7b0] sm:$0xff]
        %v474 = vld [vmem:[%s210 + $0x7b8] sm:$0xff]
        %v475 = vld [vmem:[%s210 + $0x7c0] sm:$0xff]
        %v476 = vld [vmem:[%s210 + $0x7c8] sm:$0xff]
        %v477 = vld [vmem:[%s210 + $0x7d0] sm:$0xff]
        %v478 = vld [vmem:[%s210 + $0x7d8] sm:$0xff]
        %v479 = vld [vmem:[%s210 + $0x7e0] sm:$0xff]
        %v480 = vld [vmem:[%s210 + $0x7e8] sm:$0xff]
        %v481 = vld [vmem:[%s210 + $0x7f0] sm:$0xff]
        %v482 = vld [vmem:[%s210 + $0x7f8] sm:$0xff]
        %v483 = vld [vmem:[%s210 + $0x800] sm:$0xff]
        %v484 = vld [vmem:[%s210 + $0x808] sm:$0xff]
        %v485 = vld [vmem:[%s210 + $0x810] sm:$0xff]
        %v486 = vld [vmem:[%s210 + $0x818] sm:$0xff]
        %v487 = vld [vmem:[%s210 + $0x820] sm:$0xff]
        %v488 = vld [vmem:[%s210 + $0x828] sm:$0xff]
        %v489 = vld [vmem:[%s210 + $0x830] sm:$0xff]
        %v490 = vld [vmem:[%s210 + $0x838] sm:$0xff]
        %v491 = vld [vmem:[%s210 + $0x840] sm:$0xff]
        %v492 = vld [vmem:[%s210 + $0x848] sm:$0xff]
        %v493 = vld [vmem:[%s210 + $0x850] sm:$0xff]
        %v494 = vld [vmem:[%s210 + $0x858] sm:$0xff]
        %v495 = vld [vmem:[%s210 + $0x860] sm:$0xff]
        %v496 = vld [vmem:[%s210 + $0x868] sm:$0xff]
        %v497 = vld [vmem:[%s210 + $0x870] sm:$0xff]
        %v498 = vld [vmem:[%s210 + $0x878] sm:$0xff]
        %v499 = vld [vmem:[%s210 + $0x880] sm:$0xff]
        %v500 = vld [vmem:[%s210 + $0x888] sm:$0xff]
        %v501 = vld [vmem:[%s210 + $0x890] sm:$0xff]
        %v502 = vld [vmem:[%s210 + $0x898] sm:$0xff]
        %v503 = vld [vmem:[%s210 + $0x8a0] sm:$0xff]
        %v504 = vld [vmem:[%s210 + $0x8a8] sm:$0xff]
        %v505 = vld [vmem:[%s210 + $0x8b0] sm:$0xff]
        %v506 = vld [vmem:[%s210 + $0x8b8] sm:$0xff]
        %v507 = vld [vmem:[%s210 + $0x8c0] sm:$0xff]
        %v508 = vld [vmem:[%s210 + $0x8c8] sm:$0xff]
        %v509 = vld [vmem:[%s210 + $0x8d0] sm:$0xff]
        %v510 = vld [vmem:[%s210 + $0x8d8] sm:$0xff]
        %v511 = vld [vmem:[%s210 + $0x8e0] sm:$0xff]
        %v512 = vld [vmem:[%s210 + $0x8e8] sm:$0xff]
        %v513 = vld [vmem:[%s210 + $0x8f0] sm:$0xff]
        %v514 = vld [vmem:[%s210 + $0x8f8] sm:$0xff]
        %v515 = vld [vmem:[%s210 + $0x900] sm:$0xff]
        %v516 = vld [vmem:[%s210 + $0x908] sm:$0xff]
        %v517 = vld [vmem:[%s210 + $0x910] sm:$0xff]
        %v518 = vld [vmem:[%s210 + $0x918] sm:$0xff]
        %v519 = vld [vmem:[%s210 + $0x920] sm:$0xff]
        %v520 = vld [vmem:[%s210 + $0x928] sm:$0xff]
        %v521 = vld [vmem:[%s210 + $0x930] sm:$0xff]
        %v522 = vld [vmem:[%s210 + $0x938] sm:$0xff]
        %v523 = vld [vmem:[%s210 + $0x940] sm:$0xff]
        %v524 = vld [vmem:[%s210 + $0x948] sm:$0xff]
        %v525 = vld [vmem:[%s210 + $0x950] sm:$0xff]
        %v526 = vld [vmem:[%s210 + $0x958] sm:$0xff]
        %v527 = vld [vmem:[%s210 + $0x960] sm:$0xff]
        %v528 = vld [vmem:[%s210 + $0x968] sm:$0xff]
        %v529 = vld [vmem:[%s210 + $0x970] sm:$0xff]
        %v530 = vld [vmem:[%s210 + $0x978] sm:$0xff]
        %v531 = vld [vmem:[%s210 + $0x980] sm:$0xff]
        %v532 = vld [vmem:[%s210 + $0x988] sm:$0xff]
        %v533 = vld [vmem:[%s210 + $0x990] sm:$0xff]
        %v534 = vld [vmem:[%s210 + $0x998] sm:$0xff]
        %v535 = vld [vmem:[%s210 + $0x9a0] sm:$0xff]
        %v536 = vld [vmem:[%s210 + $0x9a8] sm:$0xff]
        %v537 = vld [vmem:[%s210 + $0x9b0] sm:$0xff]
        %v538 = vld [vmem:[%s210 + $0x9b8] sm:$0xff]
        %v539 = vld [vmem:[%s210 + $0x9c0] sm:$0xff]
        %v540 = vld [vmem:[%s210 + $0x9c8] sm:$0xff]
        %v541 = vld [vmem:[%s210 + $0x9d0] sm:$0xff]
        %v542 = vld [vmem:[%s210 + $0x9d8] sm:$0xff]
        %v543 = vld [vmem:[%s210 + $0x9e0] sm:$0xff]
        %v544 = vld [vmem:[%s210 + $0x9e8] sm:$0xff]
        %v545 = vld [vmem:[%s210 + $0x9f0] sm:$0xff]
        %v546 = vld [vmem:[%s210 + $0x9f8] sm:$0xff]
        %v547 = vld [vmem:[%s210 + $0xa00] sm:$0xff]
        %v548 = vld [vmem:[%s210 + $0xa08] sm:$0xff]
        %v549 = vld [vmem:[%s210 + $0xa10] sm:$0xff]
        %v550 = vld [vmem:[%s210 + $0xa18] sm:$0xff]
        %v551 = vld [vmem:[%s210 + $0xa20] sm:$0xff]
        %v552 = vld [vmem:[%s210 + $0xa28] sm:$0xff]
        %v553 = vld [vmem:[%s210 + $0xa30] sm:$0xff]
        %v554 = vld [vmem:[%s210 + $0xa38] sm:$0xff]
        %v555 = vld [vmem:[%s210 + $0xa40] sm:$0xff]
        %v556 = vld [vmem:[%s210 + $0xa48] sm:$0xff]
        %v557 = vld [vmem:[%s210 + $0xa50] sm:$0xff]
        %v558 = vld [vmem:[%s210 + $0xa58] sm:$0xff]
        %v559 = vld [vmem:[%s210 + $0xa60] sm:$0xff]
        %v560 = vld [vmem:[%s210 + $0xa68] sm:$0xff]
        %v561 = vld [vmem:[%s210 + $0xa70] sm:$0xff]
        %v562 = vld [vmem:[%s210 + $0xa78] sm:$0xff]
        %v563 = vld [vmem:[%s210 + $0xa80] sm:$0xff]
        %v564 = vld [vmem:[%s210 + $0xa88] sm:$0xff]
        %v565 = vld [vmem:[%s210 + $0xa90] sm:$0xff]
        %v566 = vld [vmem:[%s210 + $0xa98] sm:$0xff]
        %v567 = vld [vmem:[%s210 + $0xaa0] sm:$0xff]
        %v568 = vld [vmem:[%s210 + $0xaa8] sm:$0xff]
        %v569 = vld [vmem:[%s210 + $0xab0] sm:$0xff]
        %v570 = vld [vmem:[%s210 + $0xab8] sm:$0xff]
        %v571 = vld [vmem:[%s210 + $0xac0] sm:$0xff]
        %v572 = vld [vmem:[%s210 + $0xac8] sm:$0xff]
        %v573 = vld [vmem:[%s210 + $0xad0] sm:$0xff]
        %v574 = vld [vmem:[%s210 + $0xad8] sm:$0xff]
        %v575 = vld [vmem:[%s210 + $0xae0] sm:$0xff]
        %v576 = vld [vmem:[%s210 + $0xae8] sm:$0xff]
        %v577 = vld [vmem:[%s210 + $0xaf0] sm:$0xff]
        %v578 = vld [vmem:[%s210 + $0xaf8] sm:$0xff]
        %v579 = vld [vmem:[%s210 + $0xb00] sm:$0xff]
        %v580 = vld [vmem:[%s210 + $0xb08] sm:$0xff]
        %v581 = vld [vmem:[%s210 + $0xb10] sm:$0xff]
        %v582 = vld [vmem:[%s210 + $0xb18] sm:$0xff]
        %v583 = vld [vmem:[%s210 + $0xb20] sm:$0xff]
        %v584 = vld [vmem:[%s210 + $0xb28] sm:$0xff]
        %v585 = vld [vmem:[%s210 + $0xb30] sm:$0xff]
        %v586 = vld [vmem:[%s210 + $0xb38] sm:$0xff]
        %v587 = vld [vmem:[%s210 + $0xb40] sm:$0xff]
        %v588 = vld [vmem:[%s210 + $0xb48] sm:$0xff]
        %v589 = vld [vmem:[%s210 + $0xb50] sm:$0xff]
        %v590 = vld [vmem:[%s210 + $0xb58] sm:$0xff]
        %v591 = vld [vmem:[%s210 + $0xb60] sm:$0xff]
        %v592 = vld [vmem:[%s210 + $0xb68] sm:$0xff]
        %v593 = vld [vmem:[%s210 + $0xb70] sm:$0xff]
        %v594 = vld [vmem:[%s210 + $0xb78] sm:$0xff]
        %v595 = vld [vmem:[%s210 + $0xb80] sm:$0xff]
        %v596 = vld [vmem:[%s210 + $0xb88] sm:$0xff]
        %v597 = vld [vmem:[%s210 + $0xb90] sm:$0xff]
        %v598 = vld [vmem:[%s210 + $0xb98] sm:$0xff]
        %v599 = vld [vmem:[%s210 + $0xba0] sm:$0xff]
        %v600 = vld [vmem:[%s210 + $0xba8] sm:$0xff]
        %v601 = vld [vmem:[%s210 + $0xbb0] sm:$0xff]
        %v602 = vld [vmem:[%s210 + $0xbb8] sm:$0xff]
        %v603 = vld [vmem:[%s210 + $0xbc0] sm:$0xff]
        %v604 = vld [vmem:[%s210 + $0xbc8] sm:$0xff]
        %v605 = vld [vmem:[%s210 + $0xbd0] sm:$0xff]
        %v606 = vld [vmem:[%s210 + $0xbd8] sm:$0xff]
        %v607 = vld [vmem:[%s210 + $0xbe0] sm:$0xff]
        %v608 = vld [vmem:[%s210 + $0xbe8] sm:$0xff]
        %v609 = vld [vmem:[%s210 + $0xbf0] sm:$0xff]
        %v610 = vld [vmem:[%s210 + $0xbf8] sm:$0xff]
        %v611 = vld [vmem:[%s210 + $0xc00] sm:$0xff]
        %v612 = vld [vmem:[%s210 + $0xc08] sm:$0xff]
        %v613 = vld [vmem:[%s210 + $0xc10] sm:$0xff]
        %v614 = vld [vmem:[%s210 + $0xc18] sm:$0xff]
        %v615 = vld [vmem:[%s210 + $0xc20] sm:$0xff]
        %v616 = vld [vmem:[%s210 + $0xc28] sm:$0xff]
        %v617 = vld [vmem:[%s210 + $0xc30] sm:$0xff]
        %v618 = vld [vmem:[%s210 + $0xc38] sm:$0xff]
        %v619 = vld [vmem:[%s210 + $0xc40] sm:$0xff]
        %v620 = vld [vmem:[%s210 + $0xc48] sm:$0xff]
        %v621 = vld [vmem:[%s210 + $0xc50] sm:$0xff]
        %v622 = vld [vmem:[%s210 + $0xc58] sm:$0xff]
        %v623 = vld [vmem:[%s210 + $0xc60] sm:$0xff]
        %v624 = vld [vmem:[%s210 + $0xc68] sm:$0xff]
        %v625 = vld [vmem:[%s210 + $0xc70] sm:$0xff]
        %v626 = vld [vmem:[%s210 + $0xc78] sm:$0xff]
        %v627 = vld [vmem:[%s210 + $0xc80] sm:$0xff]
        %v628 = vld [vmem:[%s210 + $0xc88] sm:$0xff]
        %v629 = vld [vmem:[%s210 + $0xc90] sm:$0xff]
        %v630 = vld [vmem:[%s210 + $0xc98] sm:$0xff]
        %v631 = vld [vmem:[%s210 + $0xca0] sm:$0xff]
        %v632 = vld [vmem:[%s210 + $0xca8] sm:$0xff]
        %v633 = vld [vmem:[%s210 + $0xcb0] sm:$0xff]
        %v634 = vld [vmem:[%s210 + $0xcb8] sm:$0xff]
        %v635 = vld [vmem:[%s210 + $0xcc0] sm:$0xff]
        %v636 = vld [vmem:[%s210 + $0xcc8] sm:$0xff]
        %v637 = vld [vmem:[%s210 + $0xcd0] sm:$0xff]
        %v638 = vld [vmem:[%s210 + $0xcd8] sm:$0xff]
        %v639 = vld [vmem:[%s210 + $0xce0] sm:$0xff]
        %v640 = vld [vmem:[%s210 + $0xce8] sm:$0xff]
        %v641 = vld [vmem:[%s210 + $0xcf0] sm:$0xff]
        %v642 = vld [vmem:[%s210 + $0xcf8] sm:$0xff]
        %v643 = vld [vmem:[%s210 + $0xd00] sm:$0xff]
        %v644 = vld [vmem:[%s210 + $0xd08] sm:$0xff]
        %v645 = vld [vmem:[%s210 + $0xd10] sm:$0xff]
        %v646 = vld [vmem:[%s210 + $0xd18] sm:$0xff]
        %v647 = vld [vmem:[%s210 + $0xd20] sm:$0xff]
        %v648 = vld [vmem:[%s210 + $0xd28] sm:$0xff]
        %v649 = vld [vmem:[%s210 + $0xd30] sm:$0xff]
        %v650 = vld [vmem:[%s210 + $0xd38] sm:$0xff]
        %v651 = vld [vmem:[%s210 + $0xd40] sm:$0xff]
        %v652 = vld [vmem:[%s210 + $0xd48] sm:$0xff]
        %v653 = vld [vmem:[%s210 + $0xd50] sm:$0xff]
        %v654 = vld [vmem:[%s210 + $0xd58] sm:$0xff]
        %v655 = vld [vmem:[%s210 + $0xd60] sm:$0xff]
        %v656 = vld [vmem:[%s210 + $0xd68] sm:$0xff]
        %v657 = vld [vmem:[%s210 + $0xd70] sm:$0xff]
        %v658 = vld [vmem:[%s210 + $0xd78] sm:$0xff]
        %v659 = vld [vmem:[%s210 + $0xd80] sm:$0xff]
        %v660 = vld [vmem:[%s210 + $0xd88] sm:$0xff]
        %v661 = vld [vmem:[%s210 + $0xd90] sm:$0xff]
        %v662 = vld [vmem:[%s210 + $0xd98] sm:$0xff]
        %v663 = vld [vmem:[%s210 + $0xda0] sm:$0xff]
        %v664 = vld [vmem:[%s210 + $0xda8] sm:$0xff]
        %v665 = vld [vmem:[%s210 + $0xdb0] sm:$0xff]
        %v666 = vld [vmem:[%s210 + $0xdb8] sm:$0xff]
        %v667 = vld [vmem:[%s210 + $0xdc0] sm:$0xff]
        %v668 = vld [vmem:[%s210 + $0xdc8] sm:$0xff]
        %v669 = vld [vmem:[%s210 + $0xdd0] sm:$0xff]
        %v670 = vld [vmem:[%s210 + $0xdd8] sm:$0xff]
        %v671 = vld [vmem:[%s210 + $0xde0] sm:$0xff]
        %v672 = vld [vmem:[%s210 + $0xde8] sm:$0xff]
        %v673 = vld [vmem:[%s210 + $0xdf0] sm:$0xff]
        %v674 = vld [vmem:[%s210 + $0xdf8] sm:$0xff]
        %v675 = vld [vmem:[%s210 + $0xe00] sm:$0xff]
        %v676 = vld [vmem:[%s210 + $0xe08] sm:$0xff]
        %v677 = vld [vmem:[%s210 + $0xe10] sm:$0xff]
        %v678 = vld [vmem:[%s210 + $0xe18] sm:$0xff]
        %v679 = vld [vmem:[%s210 + $0xe20] sm:$0xff]
        %v680 = vld [vmem:[%s210 + $0xe28] sm:$0xff]
        %v681 = vld [vmem:[%s210 + $0xe30] sm:$0xff]
        %v682 = vld [vmem:[%s210 + $0xe38] sm:$0xff]
        %v683 = vld [vmem:[%s210 + $0xe40] sm:$0xff]
        %v684 = vld [vmem:[%s210 + $0xe48] sm:$0xff]
        %v685 = vld [vmem:[%s210 + $0xe50] sm:$0xff]
        %v686 = vld [vmem:[%s210 + $0xe58] sm:$0xff]
        %v687 = vld [vmem:[%s210 + $0xe60] sm:$0xff]
        %v688 = vld [vmem:[%s210 + $0xe68] sm:$0xff]
        %v689 = vld [vmem:[%s210 + $0xe70] sm:$0xff]
        %v690 = vld [vmem:[%s210 + $0xe78] sm:$0xff]
        %v691 = vld [vmem:[%s210 + $0xe80] sm:$0xff]
        %v692 = vld [vmem:[%s210 + $0xe88] sm:$0xff]
        %v693 = vld [vmem:[%s210 + $0xe90] sm:$0xff]
        %v694 = vld [vmem:[%s210 + $0xe98] sm:$0xff]
        %v695 = vld [vmem:[%s210 + $0xea0] sm:$0xff]
        %v696 = vld [vmem:[%s210 + $0xea8] sm:$0xff]
        %v697 = vld [vmem:[%s210 + $0xeb0] sm:$0xff]
        %v698 = vld [vmem:[%s210 + $0xeb8] sm:$0xff]
        %v699 = vld [vmem:[%s210 + $0xec0] sm:$0xff]
        %v700 = vld [vmem:[%s210 + $0xec8] sm:$0xff]
        %v701 = vld [vmem:[%s210 + $0xed0] sm:$0xff]
        %v702 = vld [vmem:[%s210 + $0xed8] sm:$0xff]
        %v703 = vld [vmem:[%s210 + $0xee0] sm:$0xff]
        %v704 = vld [vmem:[%s210 + $0xee8] sm:$0xff]
        %v705 = vld [vmem:[%s210 + $0xef0] sm:$0xff]
        %v706 = vld [vmem:[%s210 + $0xef8] sm:$0xff]
        %v707 = vld [vmem:[%s210 + $0xf00] sm:$0xff]
        %v708 = vld [vmem:[%s210 + $0xf08] sm:$0xff]
        %v709 = vld [vmem:[%s210 + $0xf10] sm:$0xff]
        %v710 = vld [vmem:[%s210 + $0xf18] sm:$0xff]
        %v711 = vld [vmem:[%s210 + $0xf20] sm:$0xff]
        %v712 = vld [vmem:[%s210 + $0xf28] sm:$0xff]
        %v713 = vld [vmem:[%s210 + $0xf30] sm:$0xff]
        %v714 = vld [vmem:[%s210 + $0xf38] sm:$0xff]
        %v715 = vld [vmem:[%s210 + $0xf40] sm:$0xff]
        %v716 = vld [vmem:[%s210 + $0xf48] sm:$0xff]
        %v717 = vld [vmem:[%s210 + $0xf50] sm:$0xff]
        %v718 = vld [vmem:[%s210 + $0xf58] sm:$0xff]
        %v719 = vld [vmem:[%s210 + $0xf60] sm:$0xff]
        %v720 = vld [vmem:[%s210 + $0xf68] sm:$0xff]
        %v721 = vld [vmem:[%s210 + $0xf70] sm:$0xff]
        %v722 = vld [vmem:[%s210 + $0xf78] sm:$0xff]
        %v723 = vld [vmem:[%s210 + $0xf80] sm:$0xff]
        %v724 = vld [vmem:[%s210 + $0xf88] sm:$0xff]
        %v725 = vld [vmem:[%s210 + $0xf90] sm:$0xff]
        %v726 = vld [vmem:[%s210 + $0xf98] sm:$0xff]
        %v727 = vld [vmem:[%s210 + $0xfa0] sm:$0xff]
        %v728 = vld [vmem:[%s210 + $0xfa8] sm:$0xff]
        %v729 = vld [vmem:[%s210 + $0xfb0] sm:$0xff]
        %v730 = vld [vmem:[%s210 + $0xfb8] sm:$0xff]
        %v731 = vld [vmem:[%s210 + $0xfc0] sm:$0xff]
        %v732 = vld [vmem:[%s210 + $0xfc8] sm:$0xff]
        %v733 = vld [vmem:[%s210 + $0xfd0] sm:$0xff]
        %v734 = vld [vmem:[%s210 + $0xfd8] sm:$0xff]
        %v735 = vld [vmem:[%s210 + $0xfe0] sm:$0xff]
        %v736 = vld [vmem:[%s210 + $0xfe8] sm:$0xff]
        %v737 = vld [vmem:[%s210 + $0xff0] sm:$0xff]
        %v738 = vld [vmem:[%s210 + $0xff8] sm:$0xff]
        %v747 = vcombine.high %v219, %v219
        %v749 = vunpack.c.l.s4 1983009808
        %v750 = vunpack.c.0.s8 %v749
        %v751 = vlaneseq
        %v752 = vshrl.u32 %v751, 7
        %v753 = vsub.s32 %v750, %v752
        %v754 = vrot.slane %v219, %v753
        %v756 = vunpack.c.l.s4 1983009808
        %v757 = vunpack.c.0.s8 %v756
        %v758 = vlaneseq
        %v759 = vshrl.u32 %v758, 7
        %v760 = vsub.s32 %v757, %v759
        %v761 = vrot.slane %v747, %v760
        %v762 = vcombine.high %v754, %v754
        %v763 = vcombine.high %v761, %v761
        %v764 = vcombine.high %v220, %v220
        %v766 = vunpack.c.l.s4 1983009808
        %v767 = vunpack.c.0.s8 %v766
        %v768 = vlaneseq
        %v769 = vshrl.u32 %v768, 7
        %v770 = vsub.s32 %v767, %v769
        %v771 = vrot.slane %v220, %v770
        %v773 = vunpack.c.l.s4 1983009808
        %v774 = vunpack.c.0.s8 %v773
        %v775 = vlaneseq
        %v776 = vshrl.u32 %v775, 7
        %v777 = vsub.s32 %v774, %v776
        %v778 = vrot.slane %v764, %v777
        %v779 = vcombine.high %v771, %v771
        %v780 = vcombine.high %v778, %v778
        %v781 = vcombine.high %v221, %v221
        %v783 = vunpack.c.l.s4 1983009808
        %v784 = vunpack.c.0.s8 %v783
        %v785 = vlaneseq
        %v786 = vshrl.u32 %v785, 7
        %v787 = vsub.s32 %v784, %v786
        %v788 = vrot.slane %v221, %v787
        %v790 = vunpack.c.l.s4 1983009808
        %v791 = vunpack.c.0.s8 %v790
        %v792 = vlaneseq
        %v793 = vshrl.u32 %v792, 7
        %v794 = vsub.s32 %v791, %v793
        %v795 = vrot.slane %v781, %v794
        %v796 = vcombine.high %v788, %v788
        %v797 = vcombine.high %v795, %v795
        %v798 = vcombine.high %v222, %v222
        %v800 = vunpack.c.l.s4 1983009808
        %v801 = vunpack.c.0.s8 %v800
        %v802 = vlaneseq
        %v803 = vshrl.u32 %v802, 7
        %v804 = vsub.s32 %v801, %v803
        %v805 = vrot.slane %v222, %v804
        %v807 = vunpack.c.l.s4 1983009808
        %v808 = vunpack.c.0.s8 %v807
        %v809 = vlaneseq
        %v810 = vshrl.u32 %v809, 7
        %v811 = vsub.s32 %v808, %v810
        %v812 = vrot.slane %v798, %v811
        %v813 = vcombine.high %v805, %v805
        %v814 = vcombine.high %v812, %v812
        %v815 = vcombine.high %v223, %v223
        %v817 = vunpack.c.l.s4 1983009808
        %v818 = vunpack.c.0.s8 %v817
        %v819 = vlaneseq
        %v820 = vshrl.u32 %v819, 7
        %v821 = vsub.s32 %v818, %v820
        %v822 = vrot.slane %v223, %v821
        %v824 = vunpack.c.l.s4 1983009808
        %v825 = vunpack.c.0.s8 %v824
        %v826 = vlaneseq
        %v827 = vshrl.u32 %v826, 7
        %v828 = vsub.s32 %v825, %v827
        %v829 = vrot.slane %v815, %v828
        %v830 = vcombine.high %v822, %v822
        %v831 = vcombine.high %v829, %v829
        %v832 = vcombine.high %v224, %v224
        %v834 = vunpack.c.l.s4 1983009808
        %v835 = vunpack.c.0.s8 %v834
        %v836 = vlaneseq
        %v837 = vshrl.u32 %v836, 7
        %v838 = vsub.s32 %v835, %v837
        %v839 = vrot.slane %v224, %v838
        %v841 = vunpack.c.l.s4 1983009808
        %v842 = vunpack.c.0.s8 %v841
        %v843 = vlaneseq
        %v844 = vshrl.u32 %v843, 7
        %v845 = vsub.s32 %v842, %v844
        %v846 = vrot.slane %v832, %v845
        %v847 = vcombine.high %v839, %v839
        %v848 = vcombine.high %v846, %v846
        %v849 = vcombine.high %v225, %v225
        %v851 = vunpack.c.l.s4 1983009808
        %v852 = vunpack.c.0.s8 %v851
        %v853 = vlaneseq
        %v854 = vshrl.u32 %v853, 7
        %v855 = vsub.s32 %v852, %v854
        %v856 = vrot.slane %v225, %v855
        %v858 = vunpack.c.l.s4 1983009808
        %v859 = vunpack.c.0.s8 %v858
        %v860 = vlaneseq
        %v861 = vshrl.u32 %v860, 7
        %v862 = vsub.s32 %v859, %v861
        %v863 = vrot.slane %v849, %v862
        %v864 = vcombine.high %v856, %v856
        %v865 = vcombine.high %v863, %v863
        %v866 = vcombine.high %v226, %v226
        %v868 = vunpack.c.l.s4 1983009808
        %v869 = vunpack.c.0.s8 %v868
        %v870 = vlaneseq
        %v871 = vshrl.u32 %v870, 7
        %v872 = vsub.s32 %v869, %v871
        %v873 = vrot.slane %v226, %v872
        %v875 = vunpack.c.l.s4 1983009808
        %v876 = vunpack.c.0.s8 %v875
        %v877 = vlaneseq
        %v878 = vshrl.u32 %v877, 7
        %v879 = vsub.s32 %v876, %v878
        %v880 = vrot.slane %v866, %v879
        %v881 = vcombine.high %v873, %v873
        %v882 = vcombine.high %v880, %v880
        %915 = vmatprep.subr.mxu0 0.0
        %916 = vmatpush1.msra.mxu0 %v242
        %917 = vmatprep.subr.mxu0 0.0
        %918 = vmatpush1.msra.mxu0 %v241
        %919 = vmatprep.subr.mxu0 0.0
        %920 = vmatpush1.msra.mxu0 %v240
        %921 = vmatprep.subr.mxu0 0.0
        %922 = vmatpush1.msra.mxu0 %v239
        %923 = vmatprep.subr.mxu0 0.0
        %924 = vmatpush1.msra.mxu0 %v238
        %925 = vmatprep.subr.mxu0 0.0
        %926 = vmatpush1.msra.mxu0 %v237
        %927 = vmatprep.subr.mxu0 0.0
        %928 = vmatpush1.msra.mxu0 %v236
        %929 = vmatprep.subr.mxu0 0.0
        %930 = vmatpush1.msra.mxu0 %v235
        %931 = vmatprep.subr.mxu0 0.0
        %932 = vmatpush1.msra.mxu0 %v234
        %933 = vmatprep.subr.mxu0 0.0
        %934 = vmatpush1.msra.mxu0 %v233
        %935 = vmatprep.subr.mxu0 0.0
        %936 = vmatpush1.msra.mxu0 %v232
        %937 = vmatprep.subr.mxu0 0.0
        %938 = vmatpush1.msra.mxu0 %v231
        %939 = vmatprep.subr.mxu0 0.0
        %940 = vmatpush1.msra.mxu0 %v230
        %941 = vmatprep.subr.mxu0 0.0
        %942 = vmatpush1.msra.mxu0 %v229
        %943 = vmatprep.subr.mxu0 0.0
        %944 = vmatpush1.msra.mxu0 %v228
        %945 = vmatprep.subr.mxu0 0.0
        %946 = vmatpush1.msra.mxu0 %v227
        %947 = vmatprep.subr.mxu0 0.0
        %948 = vmatpush2.msra.mxu0 %v258
        %949 = vmatprep.subr.mxu0 0.0
        %950 = vmatpush2.msra.mxu0 %v257
        %951 = vmatprep.subr.mxu0 0.0
        %952 = vmatpush2.msra.mxu0 %v256
        %953 = vmatprep.subr.mxu0 0.0
        %954 = vmatpush2.msra.mxu0 %v255
        %955 = vmatprep.subr.mxu0 0.0
        %956 = vmatpush2.msra.mxu0 %v254
        %957 = vmatprep.subr.mxu0 0.0
        %958 = vmatpush2.msra.mxu0 %v253
        %959 = vmatprep.subr.mxu0 0.0
        %960 = vmatpush2.msra.mxu0 %v252
        %961 = vmatprep.subr.mxu0 0.0
        %962 = vmatpush2.msra.mxu0 %v251
        %963 = vmatprep.subr.mxu0 0.0
        %964 = vmatpush2.msra.mxu0 %v250
        %965 = vmatprep.subr.mxu0 0.0
        %966 = vmatpush2.msra.mxu0 %v249
        %967 = vmatprep.subr.mxu0 0.0
        %968 = vmatpush2.msra.mxu0 %v248
        %969 = vmatprep.subr.mxu0 0.0
        %970 = vmatpush2.msra.mxu0 %v247
        %971 = vmatprep.subr.mxu0 0.0
        %972 = vmatpush2.msra.mxu0 %v246
        %973 = vmatprep.subr.mxu0 0.0
        %974 = vmatpush2.msra.mxu0 %v245
        %975 = vmatprep.subr.mxu0 0.0
        %976 = vmatpush2.msra.mxu0 %v244
        %977 = vmatprep.subr.mxu0 0.0
        %978 = vmatpush2.msra.mxu0 %v243
        %979 = vmatprep.mubr.f32.mxu0 %v762
        %980 = vmatmul.mubr.f32.gmra.mxu0 %v754
        %v981 = vpop.f32.mrf.mxu0
        %v982 = vadd.f32 0.0, %v981
        %v983 = vpop.f32.mrf.mxu0
        %984 = vdwg.mxu0
        %985 = vmatprep.subr.mxu0 0.0
        %986 = vmatpush1.msra.mxu0 %v274
        %987 = vmatprep.subr.mxu0 0.0
        %988 = vmatpush1.msra.mxu0 %v273
        %989 = vmatprep.subr.mxu0 0.0
        %990 = vmatpush1.msra.mxu0 %v272
        %991 = vmatprep.subr.mxu0 0.0
        %992 = vmatpush1.msra.mxu0 %v271
        %993 = vmatprep.subr.mxu0 0.0
        %994 = vmatpush1.msra.mxu0 %v270
        %995 = vmatprep.subr.mxu0 0.0
        %996 = vmatpush1.msra.mxu0 %v269
        %997 = vmatprep.subr.mxu0 0.0
        %998 = vmatpush1.msra.mxu0 %v268
        %999 = vmatprep.subr.mxu0 0.0
        %1000 = vmatpush1.msra.mxu0 %v267
        %1001 = vmatprep.subr.mxu0 0.0
        %1002 = vmatpush1.msra.mxu0 %v266
        %1003 = vmatprep.subr.mxu0 0.0
        %1004 = vmatpush1.msra.mxu0 %v265
        %1005 = vmatprep.subr.mxu0 0.0
        %1006 = vmatpush1.msra.mxu0 %v264
        %1007 = vmatprep.subr.mxu0 0.0
        %1008 = vmatpush1.msra.mxu0 %v263
        %1009 = vmatprep.subr.mxu0 0.0
        %1010 = vmatpush1.msra.mxu0 %v262
        %1011 = vmatprep.subr.mxu0 0.0
        %1012 = vmatpush1.msra.mxu0 %v261
        %1013 = vmatprep.subr.mxu0 0.0
        %1014 = vmatpush1.msra.mxu0 %v260
        %1015 = vmatprep.subr.mxu0 0.0
        %1016 = vmatpush1.msra.mxu0 %v259
        %1017 = vmatprep.subr.mxu0 0.0
        %1018 = vmatpush2.msra.mxu0 %v290
        %1019 = vmatprep.subr.mxu0 0.0
        %1020 = vmatpush2.msra.mxu0 %v289
        %1021 = vmatprep.subr.mxu0 0.0
        %1022 = vmatpush2.msra.mxu0 %v288
        %1023 = vmatprep.subr.mxu0 0.0
        %1024 = vmatpush2.msra.mxu0 %v287
        %1025 = vmatprep.subr.mxu0 0.0
        %1026 = vmatpush2.msra.mxu0 %v286
        %1027 = vmatprep.subr.mxu0 0.0
        %1028 = vmatpush2.msra.mxu0 %v285
        %1029 = vmatprep.subr.mxu0 0.0
        %1030 = vmatpush2.msra.mxu0 %v284
        %1031 = vmatprep.subr.mxu0 0.0
        %1032 = vmatpush2.msra.mxu0 %v283
        %1033 = vmatprep.subr.mxu0 0.0
        %1034 = vmatpush2.msra.mxu0 %v282
        %1035 = vmatprep.subr.mxu0 0.0
        %1036 = vmatpush2.msra.mxu0 %v281
        %1037 = vmatprep.subr.mxu0 0.0
        %1038 = vmatpush2.msra.mxu0 %v280
        %1039 = vmatprep.subr.mxu0 0.0
        %1040 = vmatpush2.msra.mxu0 %v279
        %1041 = vmatprep.subr.mxu0 0.0
        %1042 = vmatpush2.msra.mxu0 %v278
        %1043 = vmatprep.subr.mxu0 0.0
        %1044 = vmatpush2.msra.mxu0 %v277
        %1045 = vmatprep.subr.mxu0 0.0
        %1046 = vmatpush2.msra.mxu0 %v276
        %1047 = vmatprep.subr.mxu0 0.0
        %1048 = vmatpush2.msra.mxu0 %v275
        %1049 = vmatprep.mubr.f32.mxu0 %v763
        %1050 = vmatmul.mubr.f32.gmra.mxu0 %v761
        %v1051 = vpop.f32.mrf.mxu0
        %v1052 = vadd.f32 %v982, %v1051
        %v1053 = vpop.f32.mrf.mxu0
        %1054 = vdwg.mxu0
        %1055 = vmatprep.subr.mxu0 0.0
        %1056 = vmatpush1.msra.mxu0 %v306
        %1057 = vmatprep.subr.mxu0 0.0
        %1058 = vmatpush1.msra.mxu0 %v305
        %1059 = vmatprep.subr.mxu0 0.0
        %1060 = vmatpush1.msra.mxu0 %v304
        %1061 = vmatprep.subr.mxu0 0.0
        %1062 = vmatpush1.msra.mxu0 %v303
        %1063 = vmatprep.subr.mxu0 0.0
        %1064 = vmatpush1.msra.mxu0 %v302
        %1065 = vmatprep.subr.mxu0 0.0
        %1066 = vmatpush1.msra.mxu0 %v301
        %1067 = vmatprep.subr.mxu0 0.0
        %1068 = vmatpush1.msra.mxu0 %v300
        %1069 = vmatprep.subr.mxu0 0.0
        %1070 = vmatpush1.msra.mxu0 %v299
        %1071 = vmatprep.subr.mxu0 0.0
        %1072 = vmatpush1.msra.mxu0 %v298
        %1073 = vmatprep.subr.mxu0 0.0
        %1074 = vmatpush1.msra.mxu0 %v297
        %1075 = vmatprep.subr.mxu0 0.0
        %1076 = vmatpush1.msra.mxu0 %v296
        %1077 = vmatprep.subr.mxu0 0.0
        %1078 = vmatpush1.msra.mxu0 %v295
        %1079 = vmatprep.subr.mxu0 0.0
        %1080 = vmatpush1.msra.mxu0 %v294
        %1081 = vmatprep.subr.mxu0 0.0
        %1082 = vmatpush1.msra.mxu0 %v293
        %1083 = vmatprep.subr.mxu0 0.0
        %1084 = vmatpush1.msra.mxu0 %v292
        %1085 = vmatprep.subr.mxu0 0.0
        %1086 = vmatpush1.msra.mxu0 %v291
        %1087 = vmatprep.subr.mxu0 0.0
        %1088 = vmatpush2.msra.mxu0 %v322
        %1089 = vmatprep.subr.mxu0 0.0
        %1090 = vmatpush2.msra.mxu0 %v321
        %1091 = vmatprep.subr.mxu0 0.0
        %1092 = vmatpush2.msra.mxu0 %v320
        %1093 = vmatprep.subr.mxu0 0.0
        %1094 = vmatpush2.msra.mxu0 %v319
        %1095 = vmatprep.subr.mxu0 0.0
        %1096 = vmatpush2.msra.mxu0 %v318
        %1097 = vmatprep.subr.mxu0 0.0
        %1098 = vmatpush2.msra.mxu0 %v317
        %1099 = vmatprep.subr.mxu0 0.0
        %1100 = vmatpush2.msra.mxu0 %v316
        %1101 = vmatprep.subr.mxu0 0.0
        %1102 = vmatpush2.msra.mxu0 %v315
        %1103 = vmatprep.subr.mxu0 0.0
        %1104 = vmatpush2.msra.mxu0 %v314
        %1105 = vmatprep.subr.mxu0 0.0
        %1106 = vmatpush2.msra.mxu0 %v313
        %1107 = vmatprep.subr.mxu0 0.0
        %1108 = vmatpush2.msra.mxu0 %v312
        %1109 = vmatprep.subr.mxu0 0.0
        %1110 = vmatpush2.msra.mxu0 %v311
        %1111 = vmatprep.subr.mxu0 0.0
        %1112 = vmatpush2.msra.mxu0 %v310
        %1113 = vmatprep.subr.mxu0 0.0
        %1114 = vmatpush2.msra.mxu0 %v309
        %1115 = vmatprep.subr.mxu0 0.0
        %1116 = vmatpush2.msra.mxu0 %v308
        %1117 = vmatprep.subr.mxu0 0.0
        %1118 = vmatpush2.msra.mxu0 %v307
        %1119 = vmatprep.mubr.f32.mxu0 %v779
        %1120 = vmatmul.mubr.f32.gmra.mxu0 %v771
        %v1121 = vpop.f32.mrf.mxu0
        %v1122 = vadd.f32 %v1052, %v1121
        %v1123 = vpop.f32.mrf.mxu0
        %1124 = vdwg.mxu0
        %1125 = vmatprep.subr.mxu0 0.0
        %1126 = vmatpush1.msra.mxu0 %v338
        %1127 = vmatprep.subr.mxu0 0.0
        %1128 = vmatpush1.msra.mxu0 %v337
        %1129 = vmatprep.subr.mxu0 0.0
        %1130 = vmatpush1.msra.mxu0 %v336
        %1131 = vmatprep.subr.mxu0 0.0
        %1132 = vmatpush1.msra.mxu0 %v335
        %1133 = vmatprep.subr.mxu0 0.0
        %1134 = vmatpush1.msra.mxu0 %v334
        %1135 = vmatprep.subr.mxu0 0.0
        %1136 = vmatpush1.msra.mxu0 %v333
        %1137 = vmatprep.subr.mxu0 0.0
        %1138 = vmatpush1.msra.mxu0 %v332
        %1139 = vmatprep.subr.mxu0 0.0
        %1140 = vmatpush1.msra.mxu0 %v331
        %1141 = vmatprep.subr.mxu0 0.0
        %1142 = vmatpush1.msra.mxu0 %v330
        %1143 = vmatprep.subr.mxu0 0.0
        %1144 = vmatpush1.msra.mxu0 %v329
        %1145 = vmatprep.subr.mxu0 0.0
        %1146 = vmatpush1.msra.mxu0 %v328
        %1147 = vmatprep.subr.mxu0 0.0
        %1148 = vmatpush1.msra.mxu0 %v327
        %1149 = vmatprep.subr.mxu0 0.0
        %1150 = vmatpush1.msra.mxu0 %v326
        %1151 = vmatprep.subr.mxu0 0.0
        %1152 = vmatpush1.msra.mxu0 %v325
        %1153 = vmatprep.subr.mxu0 0.0
        %1154 = vmatpush1.msra.mxu0 %v324
        %1155 = vmatprep.subr.mxu0 0.0
        %1156 = vmatpush1.msra.mxu0 %v323
        %1157 = vmatprep.subr.mxu0 0.0
        %1158 = vmatpush2.msra.mxu0 %v354
        %1159 = vmatprep.subr.mxu0 0.0
        %1160 = vmatpush2.msra.mxu0 %v353
        %1161 = vmatprep.subr.mxu0 0.0
        %1162 = vmatpush2.msra.mxu0 %v352
        %1163 = vmatprep.subr.mxu0 0.0
        %1164 = vmatpush2.msra.mxu0 %v351
        %1165 = vmatprep.subr.mxu0 0.0
        %1166 = vmatpush2.msra.mxu0 %v350
        %1167 = vmatprep.subr.mxu0 0.0
        %1168 = vmatpush2.msra.mxu0 %v349
        %1169 = vmatprep.subr.mxu0 0.0
        %1170 = vmatpush2.msra.mxu0 %v348
        %1171 = vmatprep.subr.mxu0 0.0
        %1172 = vmatpush2.msra.mxu0 %v347
        %1173 = vmatprep.subr.mxu0 0.0
        %1174 = vmatpush2.msra.mxu0 %v346
        %1175 = vmatprep.subr.mxu0 0.0
        %1176 = vmatpush2.msra.mxu0 %v345
        %1177 = vmatprep.subr.mxu0 0.0
        %1178 = vmatpush2.msra.mxu0 %v344
        %1179 = vmatprep.subr.mxu0 0.0
        %1180 = vmatpush2.msra.mxu0 %v343
        %1181 = vmatprep.subr.mxu0 0.0
        %1182 = vmatpush2.msra.mxu0 %v342
        %1183 = vmatprep.subr.mxu0 0.0
        %1184 = vmatpush2.msra.mxu0 %v341
        %1185 = vmatprep.subr.mxu0 0.0
        %1186 = vmatpush2.msra.mxu0 %v340
        %1187 = vmatprep.subr.mxu0 0.0
        %1188 = vmatpush2.msra.mxu0 %v339
        %1189 = vmatprep.mubr.f32.mxu0 %v780
        %1190 = vmatmul.mubr.f32.gmra.mxu0 %v778
        %v1191 = vpop.f32.mrf.mxu0
        %v1192 = vadd.f32 %v1122, %v1191
        %v1193 = vpop.f32.mrf.mxu0
        %1194 = vdwg.mxu0
        %1195 = vmatprep.subr.mxu0 0.0
        %1196 = vmatpush1.msra.mxu0 %v370
        %1197 = vmatprep.subr.mxu0 0.0
        %1198 = vmatpush1.msra.mxu0 %v369
        %1199 = vmatprep.subr.mxu0 0.0
        %1200 = vmatpush1.msra.mxu0 %v368
        %1201 = vmatprep.subr.mxu0 0.0
        %1202 = vmatpush1.msra.mxu0 %v367
        %1203 = vmatprep.subr.mxu0 0.0
        %1204 = vmatpush1.msra.mxu0 %v366
        %1205 = vmatprep.subr.mxu0 0.0
        %1206 = vmatpush1.msra.mxu0 %v365
        %1207 = vmatprep.subr.mxu0 0.0
        %1208 = vmatpush1.msra.mxu0 %v364
        %1209 = vmatprep.subr.mxu0 0.0
        %1210 = vmatpush1.msra.mxu0 %v363
        %1211 = vmatprep.subr.mxu0 0.0
        %1212 = vmatpush1.msra.mxu0 %v362
        %1213 = vmatprep.subr.mxu0 0.0
        %1214 = vmatpush1.msra.mxu0 %v361
        %1215 = vmatprep.subr.mxu0 0.0
        %1216 = vmatpush1.msra.mxu0 %v360
        %1217 = vmatprep.subr.mxu0 0.0
        %1218 = vmatpush1.msra.mxu0 %v359
        %1219 = vmatprep.subr.mxu0 0.0
        %1220 = vmatpush1.msra.mxu0 %v358
        %1221 = vmatprep.subr.mxu0 0.0
        %1222 = vmatpush1.msra.mxu0 %v357
        %1223 = vmatprep.subr.mxu0 0.0
        %1224 = vmatpush1.msra.mxu0 %v356
        %1225 = vmatprep.subr.mxu0 0.0
        %1226 = vmatpush1.msra.mxu0 %v355
        %1227 = vmatprep.subr.mxu0 0.0
        %1228 = vmatpush2.msra.mxu0 %v386
        %1229 = vmatprep.subr.mxu0 0.0
        %1230 = vmatpush2.msra.mxu0 %v385
        %1231 = vmatprep.subr.mxu0 0.0
        %1232 = vmatpush2.msra.mxu0 %v384
        %1233 = vmatprep.subr.mxu0 0.0
        %1234 = vmatpush2.msra.mxu0 %v383
        %1235 = vmatprep.subr.mxu0 0.0
        %1236 = vmatpush2.msra.mxu0 %v382
        %1237 = vmatprep.subr.mxu0 0.0
        %1238 = vmatpush2.msra.mxu0 %v381
        %1239 = vmatprep.subr.mxu0 0.0
        %1240 = vmatpush2.msra.mxu0 %v380
        %1241 = vmatprep.subr.mxu0 0.0
        %1242 = vmatpush2.msra.mxu0 %v379
        %1243 = vmatprep.subr.mxu0 0.0
        %1244 = vmatpush2.msra.mxu0 %v378
        %1245 = vmatprep.subr.mxu0 0.0
        %1246 = vmatpush2.msra.mxu0 %v377
        %1247 = vmatprep.subr.mxu0 0.0
        %1248 = vmatpush2.msra.mxu0 %v376
        %1249 = vmatprep.subr.mxu0 0.0
        %1250 = vmatpush2.msra.mxu0 %v375
        %1251 = vmatprep.subr.mxu0 0.0
        %1252 = vmatpush2.msra.mxu0 %v374
        %1253 = vmatprep.subr.mxu0 0.0
        %1254 = vmatpush2.msra.mxu0 %v373
        %1255 = vmatprep.subr.mxu0 0.0
        %1256 = vmatpush2.msra.mxu0 %v372
        %1257 = vmatprep.subr.mxu0 0.0
        %1258 = vmatpush2.msra.mxu0 %v371
        %1259 = vmatprep.mubr.f32.mxu0 %v796
        %1260 = vmatmul.mubr.f32.gmra.mxu0 %v788
        %v1261 = vpop.f32.mrf.mxu0
        %v1262 = vadd.f32 %v1192, %v1261
        %v1263 = vpop.f32.mrf.mxu0
        %1264 = vdwg.mxu0
        %1265 = vmatprep.subr.mxu0 0.0
        %1266 = vmatpush1.msra.mxu0 %v402
        %1267 = vmatprep.subr.mxu0 0.0
        %1268 = vmatpush1.msra.mxu0 %v401
        %1269 = vmatprep.subr.mxu0 0.0
        %1270 = vmatpush1.msra.mxu0 %v400
        %1271 = vmatprep.subr.mxu0 0.0
        %1272 = vmatpush1.msra.mxu0 %v399
        %1273 = vmatprep.subr.mxu0 0.0
        %1274 = vmatpush1.msra.mxu0 %v398
        %1275 = vmatprep.subr.mxu0 0.0
        %1276 = vmatpush1.msra.mxu0 %v397
        %1277 = vmatprep.subr.mxu0 0.0
        %1278 = vmatpush1.msra.mxu0 %v396
        %1279 = vmatprep.subr.mxu0 0.0
        %1280 = vmatpush1.msra.mxu0 %v395
        %1281 = vmatprep.subr.mxu0 0.0
        %1282 = vmatpush1.msra.mxu0 %v394
        %1283 = vmatprep.subr.mxu0 0.0
        %1284 = vmatpush1.msra.mxu0 %v393
        %1285 = vmatprep.subr.mxu0 0.0
        %1286 = vmatpush1.msra.mxu0 %v392
        %1287 = vmatprep.subr.mxu0 0.0
        %1288 = vmatpush1.msra.mxu0 %v391
        %1289 = vmatprep.subr.mxu0 0.0
        %1290 = vmatpush1.msra.mxu0 %v390
        %1291 = vmatprep.subr.mxu0 0.0
        %1292 = vmatpush1.msra.mxu0 %v389
        %1293 = vmatprep.subr.mxu0 0.0
        %1294 = vmatpush1.msra.mxu0 %v388
        %1295 = vmatprep.subr.mxu0 0.0
        %1296 = vmatpush1.msra.mxu0 %v387
        %1297 = vmatprep.subr.mxu0 0.0
        %1298 = vmatpush2.msra.mxu0 %v418
        %1299 = vmatprep.subr.mxu0 0.0
        %1300 = vmatpush2.msra.mxu0 %v417
        %1301 = vmatprep.subr.mxu0 0.0
        %1302 = vmatpush2.msra.mxu0 %v416
        %1303 = vmatprep.subr.mxu0 0.0
        %1304 = vmatpush2.msra.mxu0 %v415
        %1305 = vmatprep.subr.mxu0 0.0
        %1306 = vmatpush2.msra.mxu0 %v414
        %1307 = vmatprep.subr.mxu0 0.0
        %1308 = vmatpush2.msra.mxu0 %v413
        %1309 = vmatprep.subr.mxu0 0.0
        %1310 = vmatpush2.msra.mxu0 %v412
        %1311 = vmatprep.subr.mxu0 0.0
        %1312 = vmatpush2.msra.mxu0 %v411
        %1313 = vmatprep.subr.mxu0 0.0
        %1314 = vmatpush2.msra.mxu0 %v410
        %1315 = vmatprep.subr.mxu0 0.0
        %1316 = vmatpush2.msra.mxu0 %v409
        %1317 = vmatprep.subr.mxu0 0.0
        %1318 = vmatpush2.msra.mxu0 %v408
        %1319 = vmatprep.subr.mxu0 0.0
        %1320 = vmatpush2.msra.mxu0 %v407
        %1321 = vmatprep.subr.mxu0 0.0
        %1322 = vmatpush2.msra.mxu0 %v406
        %1323 = vmatprep.subr.mxu0 0.0
        %1324 = vmatpush2.msra.mxu0 %v405
        %1325 = vmatprep.subr.mxu0 0.0
        %1326 = vmatpush2.msra.mxu0 %v404
        %1327 = vmatprep.subr.mxu0 0.0
        %1328 = vmatpush2.msra.mxu0 %v403
        %1329 = vmatprep.mubr.f32.mxu0 %v797
        %1330 = vmatmul.mubr.f32.gmra.mxu0 %v795
        %v1331 = vpop.f32.mrf.mxu0
        %v1332 = vadd.f32 %v1262, %v1331
        %v1333 = vpop.f32.mrf.mxu0
        %1334 = vdwg.mxu0
        %1335 = vmatprep.subr.mxu0 0.0
        %1336 = vmatpush1.msra.mxu0 %v434
        %1337 = vmatprep.subr.mxu0 0.0
        %1338 = vmatpush1.msra.mxu0 %v433
        %1339 = vmatprep.subr.mxu0 0.0
        %1340 = vmatpush1.msra.mxu0 %v432
        %1341 = vmatprep.subr.mxu0 0.0
        %1342 = vmatpush1.msra.mxu0 %v431
        %1343 = vmatprep.subr.mxu0 0.0
        %1344 = vmatpush1.msra.mxu0 %v430
        %1345 = vmatprep.subr.mxu0 0.0
        %1346 = vmatpush1.msra.mxu0 %v429
        %1347 = vmatprep.subr.mxu0 0.0
        %1348 = vmatpush1.msra.mxu0 %v428
        %1349 = vmatprep.subr.mxu0 0.0
        %1350 = vmatpush1.msra.mxu0 %v427
        %1351 = vmatprep.subr.mxu0 0.0
        %1352 = vmatpush1.msra.mxu0 %v426
        %1353 = vmatprep.subr.mxu0 0.0
        %1354 = vmatpush1.msra.mxu0 %v425
        %1355 = vmatprep.subr.mxu0 0.0
        %1356 = vmatpush1.msra.mxu0 %v424
        %1357 = vmatprep.subr.mxu0 0.0
        %1358 = vmatpush1.msra.mxu0 %v423
        %1359 = vmatprep.subr.mxu0 0.0
        %1360 = vmatpush1.msra.mxu0 %v422
        %1361 = vmatprep.subr.mxu0 0.0
        %1362 = vmatpush1.msra.mxu0 %v421
        %1363 = vmatprep.subr.mxu0 0.0
        %1364 = vmatpush1.msra.mxu0 %v420
        %1365 = vmatprep.subr.mxu0 0.0
        %1366 = vmatpush1.msra.mxu0 %v419
        %1367 = vmatprep.subr.mxu0 0.0
        %1368 = vmatpush2.msra.mxu0 %v450
        %1369 = vmatprep.subr.mxu0 0.0
        %1370 = vmatpush2.msra.mxu0 %v449
        %1371 = vmatprep.subr.mxu0 0.0
        %1372 = vmatpush2.msra.mxu0 %v448
        %1373 = vmatprep.subr.mxu0 0.0
        %1374 = vmatpush2.msra.mxu0 %v447
        %1375 = vmatprep.subr.mxu0 0.0
        %1376 = vmatpush2.msra.mxu0 %v446
        %1377 = vmatprep.subr.mxu0 0.0
        %1378 = vmatpush2.msra.mxu0 %v445
        %1379 = vmatprep.subr.mxu0 0.0
        %1380 = vmatpush2.msra.mxu0 %v444
        %1381 = vmatprep.subr.mxu0 0.0
        %1382 = vmatpush2.msra.mxu0 %v443
        %1383 = vmatprep.subr.mxu0 0.0
        %1384 = vmatpush2.msra.mxu0 %v442
        %1385 = vmatprep.subr.mxu0 0.0
        %1386 = vmatpush2.msra.mxu0 %v441
        %1387 = vmatprep.subr.mxu0 0.0
        %1388 = vmatpush2.msra.mxu0 %v440
        %1389 = vmatprep.subr.mxu0 0.0
        %1390 = vmatpush2.msra.mxu0 %v439
        %1391 = vmatprep.subr.mxu0 0.0
        %1392 = vmatpush2.msra.mxu0 %v438
        %1393 = vmatprep.subr.mxu0 0.0
        %1394 = vmatpush2.msra.mxu0 %v437
        %1395 = vmatprep.subr.mxu0 0.0
        %1396 = vmatpush2.msra.mxu0 %v436
        %1397 = vmatprep.subr.mxu0 0.0
        %1398 = vmatpush2.msra.mxu0 %v435
        %1399 = vmatprep.mubr.f32.mxu0 %v813
        %1400 = vmatmul.mubr.f32.gmra.mxu0 %v805
        %v1401 = vpop.f32.mrf.mxu0
        %v1402 = vadd.f32 %v1332, %v1401
        %v1403 = vpop.f32.mrf.mxu0
        %1404 = vdwg.mxu0
        %1405 = vmatprep.subr.mxu0 0.0
        %1406 = vmatpush1.msra.mxu0 %v466
        %1407 = vmatprep.subr.mxu0 0.0
        %1408 = vmatpush1.msra.mxu0 %v465
        %1409 = vmatprep.subr.mxu0 0.0
        %1410 = vmatpush1.msra.mxu0 %v464
        %1411 = vmatprep.subr.mxu0 0.0
        %1412 = vmatpush1.msra.mxu0 %v463
        %1413 = vmatprep.subr.mxu0 0.0
        %1414 = vmatpush1.msra.mxu0 %v462
        %1415 = vmatprep.subr.mxu0 0.0
        %1416 = vmatpush1.msra.mxu0 %v461
        %1417 = vmatprep.subr.mxu0 0.0
        %1418 = vmatpush1.msra.mxu0 %v460
        %1419 = vmatprep.subr.mxu0 0.0
        %1420 = vmatpush1.msra.mxu0 %v459
        %1421 = vmatprep.subr.mxu0 0.0
        %1422 = vmatpush1.msra.mxu0 %v458
        %1423 = vmatprep.subr.mxu0 0.0
        %1424 = vmatpush1.msra.mxu0 %v457
        %1425 = vmatprep.subr.mxu0 0.0
        %1426 = vmatpush1.msra.mxu0 %v456
        %1427 = vmatprep.subr.mxu0 0.0
        %1428 = vmatpush1.msra.mxu0 %v455
        %1429 = vmatprep.subr.mxu0 0.0
        %1430 = vmatpush1.msra.mxu0 %v454
        %1431 = vmatprep.subr.mxu0 0.0
        %1432 = vmatpush1.msra.mxu0 %v453
        %1433 = vmatprep.subr.mxu0 0.0
        %1434 = vmatpush1.msra.mxu0 %v452
        %1435 = vmatprep.subr.mxu0 0.0
        %1436 = vmatpush1.msra.mxu0 %v451
        %1437 = vmatprep.subr.mxu0 0.0
        %1438 = vmatpush2.msra.mxu0 %v482
        %1439 = vmatprep.subr.mxu0 0.0
        %1440 = vmatpush2.msra.mxu0 %v481
        %1441 = vmatprep.subr.mxu0 0.0
        %1442 = vmatpush2.msra.mxu0 %v480
        %1443 = vmatprep.subr.mxu0 0.0
        %1444 = vmatpush2.msra.mxu0 %v479
        %1445 = vmatprep.subr.mxu0 0.0
        %1446 = vmatpush2.msra.mxu0 %v478
        %1447 = vmatprep.subr.mxu0 0.0
        %1448 = vmatpush2.msra.mxu0 %v477
        %1449 = vmatprep.subr.mxu0 0.0
        %1450 = vmatpush2.msra.mxu0 %v476
        %1451 = vmatprep.subr.mxu0 0.0
        %1452 = vmatpush2.msra.mxu0 %v475
        %1453 = vmatprep.subr.mxu0 0.0
        %1454 = vmatpush2.msra.mxu0 %v474
        %1455 = vmatprep.subr.mxu0 0.0
        %1456 = vmatpush2.msra.mxu0 %v473
        %1457 = vmatprep.subr.mxu0 0.0
        %1458 = vmatpush2.msra.mxu0 %v472
        %1459 = vmatprep.subr.mxu0 0.0
        %1460 = vmatpush2.msra.mxu0 %v471
        %1461 = vmatprep.subr.mxu0 0.0
        %1462 = vmatpush2.msra.mxu0 %v470
        %1463 = vmatprep.subr.mxu0 0.0
        %1464 = vmatpush2.msra.mxu0 %v469
        %1465 = vmatprep.subr.mxu0 0.0
        %1466 = vmatpush2.msra.mxu0 %v468
        %1467 = vmatprep.subr.mxu0 0.0
        %1468 = vmatpush2.msra.mxu0 %v467
        %1469 = vmatprep.mubr.f32.mxu0 %v814
        %1470 = vmatmul.mubr.f32.gmra.mxu0 %v812
        %v1471 = vpop.f32.mrf.mxu0
        %v1472 = vadd.f32 %v1402, %v1471
        %v1473 = vpop.f32.mrf.mxu0
        %1474 = vdwg.mxu0
        %1475 = vmatprep.subr.mxu0 0.0
        %1476 = vmatpush1.msra.mxu0 %v498
        %1477 = vmatprep.subr.mxu0 0.0
        %1478 = vmatpush1.msra.mxu0 %v497
        %1479 = vmatprep.subr.mxu0 0.0
        %1480 = vmatpush1.msra.mxu0 %v496
        %1481 = vmatprep.subr.mxu0 0.0
        %1482 = vmatpush1.msra.mxu0 %v495
        %1483 = vmatprep.subr.mxu0 0.0
        %1484 = vmatpush1.msra.mxu0 %v494
        %1485 = vmatprep.subr.mxu0 0.0
        %1486 = vmatpush1.msra.mxu0 %v493
        %1487 = vmatprep.subr.mxu0 0.0
        %1488 = vmatpush1.msra.mxu0 %v492
        %1489 = vmatprep.subr.mxu0 0.0
        %1490 = vmatpush1.msra.mxu0 %v491
        %1491 = vmatprep.subr.mxu0 0.0
        %1492 = vmatpush1.msra.mxu0 %v490
        %1493 = vmatprep.subr.mxu0 0.0
        %1494 = vmatpush1.msra.mxu0 %v489
        %1495 = vmatprep.subr.mxu0 0.0
        %1496 = vmatpush1.msra.mxu0 %v488
        %1497 = vmatprep.subr.mxu0 0.0
        %1498 = vmatpush1.msra.mxu0 %v487
        %1499 = vmatprep.subr.mxu0 0.0
        %1500 = vmatpush1.msra.mxu0 %v486
        %1501 = vmatprep.subr.mxu0 0.0
        %1502 = vmatpush1.msra.mxu0 %v485
        %1503 = vmatprep.subr.mxu0 0.0
        %1504 = vmatpush1.msra.mxu0 %v484
        %1505 = vmatprep.subr.mxu0 0.0
        %1506 = vmatpush1.msra.mxu0 %v483
        %1507 = vmatprep.subr.mxu0 0.0
        %1508 = vmatpush2.msra.mxu0 %v514
        %1509 = vmatprep.subr.mxu0 0.0
        %1510 = vmatpush2.msra.mxu0 %v513
        %1511 = vmatprep.subr.mxu0 0.0
        %1512 = vmatpush2.msra.mxu0 %v512
        %1513 = vmatprep.subr.mxu0 0.0
        %1514 = vmatpush2.msra.mxu0 %v511
        %1515 = vmatprep.subr.mxu0 0.0
        %1516 = vmatpush2.msra.mxu0 %v510
        %1517 = vmatprep.subr.mxu0 0.0
        %1518 = vmatpush2.msra.mxu0 %v509
        %1519 = vmatprep.subr.mxu0 0.0
        %1520 = vmatpush2.msra.mxu0 %v508
        %1521 = vmatprep.subr.mxu0 0.0
        %1522 = vmatpush2.msra.mxu0 %v507
        %1523 = vmatprep.subr.mxu0 0.0
        %1524 = vmatpush2.msra.mxu0 %v506
        %1525 = vmatprep.subr.mxu0 0.0
        %1526 = vmatpush2.msra.mxu0 %v505
        %1527 = vmatprep.subr.mxu0 0.0
        %1528 = vmatpush2.msra.mxu0 %v504
        %1529 = vmatprep.subr.mxu0 0.0
        %1530 = vmatpush2.msra.mxu0 %v503
        %1531 = vmatprep.subr.mxu0 0.0
        %1532 = vmatpush2.msra.mxu0 %v502
        %1533 = vmatprep.subr.mxu0 0.0
        %1534 = vmatpush2.msra.mxu0 %v501
        %1535 = vmatprep.subr.mxu0 0.0
        %1536 = vmatpush2.msra.mxu0 %v500
        %1537 = vmatprep.subr.mxu0 0.0
        %1538 = vmatpush2.msra.mxu0 %v499
        %1539 = vmatprep.mubr.f32.mxu0 %v830
        %1540 = vmatmul.mubr.f32.gmra.mxu0 %v822
        %v1541 = vpop.f32.mrf.mxu0
        %v1542 = vadd.f32 %v1472, %v1541
        %v1543 = vpop.f32.mrf.mxu0
        %1544 = vdwg.mxu0
        %1545 = vmatprep.subr.mxu0 0.0
        %1546 = vmatpush1.msra.mxu0 %v530
        %1547 = vmatprep.subr.mxu0 0.0
        %1548 = vmatpush1.msra.mxu0 %v529
        %1549 = vmatprep.subr.mxu0 0.0
        %1550 = vmatpush1.msra.mxu0 %v528
        %1551 = vmatprep.subr.mxu0 0.0
        %1552 = vmatpush1.msra.mxu0 %v527
        %1553 = vmatprep.subr.mxu0 0.0
        %1554 = vmatpush1.msra.mxu0 %v526
        %1555 = vmatprep.subr.mxu0 0.0
        %1556 = vmatpush1.msra.mxu0 %v525
        %1557 = vmatprep.subr.mxu0 0.0
        %1558 = vmatpush1.msra.mxu0 %v524
        %1559 = vmatprep.subr.mxu0 0.0
        %1560 = vmatpush1.msra.mxu0 %v523
        %1561 = vmatprep.subr.mxu0 0.0
        %1562 = vmatpush1.msra.mxu0 %v522
        %1563 = vmatprep.subr.mxu0 0.0
        %1564 = vmatpush1.msra.mxu0 %v521
        %1565 = vmatprep.subr.mxu0 0.0
        %1566 = vmatpush1.msra.mxu0 %v520
        %1567 = vmatprep.subr.mxu0 0.0
        %1568 = vmatpush1.msra.mxu0 %v519
        %1569 = vmatprep.subr.mxu0 0.0
        %1570 = vmatpush1.msra.mxu0 %v518
        %1571 = vmatprep.subr.mxu0 0.0
        %1572 = vmatpush1.msra.mxu0 %v517
        %1573 = vmatprep.subr.mxu0 0.0
        %1574 = vmatpush1.msra.mxu0 %v516
        %1575 = vmatprep.subr.mxu0 0.0
        %1576 = vmatpush1.msra.mxu0 %v515
        %1577 = vmatprep.subr.mxu0 0.0
        %1578 = vmatpush2.msra.mxu0 %v546
        %1579 = vmatprep.subr.mxu0 0.0
        %1580 = vmatpush2.msra.mxu0 %v545
        %1581 = vmatprep.subr.mxu0 0.0
        %1582 = vmatpush2.msra.mxu0 %v544
        %1583 = vmatprep.subr.mxu0 0.0
        %1584 = vmatpush2.msra.mxu0 %v543
        %1585 = vmatprep.subr.mxu0 0.0
        %1586 = vmatpush2.msra.mxu0 %v542
        %1587 = vmatprep.subr.mxu0 0.0
        %1588 = vmatpush2.msra.mxu0 %v541
        %1589 = vmatprep.subr.mxu0 0.0
        %1590 = vmatpush2.msra.mxu0 %v540
        %1591 = vmatprep.subr.mxu0 0.0
        %1592 = vmatpush2.msra.mxu0 %v539
        %1593 = vmatprep.subr.mxu0 0.0
        %1594 = vmatpush2.msra.mxu0 %v538
        %1595 = vmatprep.subr.mxu0 0.0
        %1596 = vmatpush2.msra.mxu0 %v537
        %1597 = vmatprep.subr.mxu0 0.0
        %1598 = vmatpush2.msra.mxu0 %v536
        %1599 = vmatprep.subr.mxu0 0.0
        %1600 = vmatpush2.msra.mxu0 %v535
        %1601 = vmatprep.subr.mxu0 0.0
        %1602 = vmatpush2.msra.mxu0 %v534
        %1603 = vmatprep.subr.mxu0 0.0
        %1604 = vmatpush2.msra.mxu0 %v533
        %1605 = vmatprep.subr.mxu0 0.0
        %1606 = vmatpush2.msra.mxu0 %v532
        %1607 = vmatprep.subr.mxu0 0.0
        %1608 = vmatpush2.msra.mxu0 %v531
        %1609 = vmatprep.mubr.f32.mxu0 %v831
        %1610 = vmatmul.mubr.f32.gmra.mxu0 %v829
        %v1611 = vpop.f32.mrf.mxu0
        %v1612 = vadd.f32 %v1542, %v1611
        %v1613 = vpop.f32.mrf.mxu0
        %1614 = vdwg.mxu0
        %1615 = vmatprep.subr.mxu0 0.0
        %1616 = vmatpush1.msra.mxu0 %v562
        %1617 = vmatprep.subr.mxu0 0.0
        %1618 = vmatpush1.msra.mxu0 %v561
        %1619 = vmatprep.subr.mxu0 0.0
        %1620 = vmatpush1.msra.mxu0 %v560
        %1621 = vmatprep.subr.mxu0 0.0
        %1622 = vmatpush1.msra.mxu0 %v559
        %1623 = vmatprep.subr.mxu0 0.0
        %1624 = vmatpush1.msra.mxu0 %v558
        %1625 = vmatprep.subr.mxu0 0.0
        %1626 = vmatpush1.msra.mxu0 %v557
        %1627 = vmatprep.subr.mxu0 0.0
        %1628 = vmatpush1.msra.mxu0 %v556
        %1629 = vmatprep.subr.mxu0 0.0
        %1630 = vmatpush1.msra.mxu0 %v555
        %1631 = vmatprep.subr.mxu0 0.0
        %1632 = vmatpush1.msra.mxu0 %v554
        %1633 = vmatprep.subr.mxu0 0.0
        %1634 = vmatpush1.msra.mxu0 %v553
        %1635 = vmatprep.subr.mxu0 0.0
        %1636 = vmatpush1.msra.mxu0 %v552
        %1637 = vmatprep.subr.mxu0 0.0
        %1638 = vmatpush1.msra.mxu0 %v551
        %1639 = vmatprep.subr.mxu0 0.0
        %1640 = vmatpush1.msra.mxu0 %v550
        %1641 = vmatprep.subr.mxu0 0.0
        %1642 = vmatpush1.msra.mxu0 %v549
        %1643 = vmatprep.subr.mxu0 0.0
        %1644 = vmatpush1.msra.mxu0 %v548
        %1645 = vmatprep.subr.mxu0 0.0
        %1646 = vmatpush1.msra.mxu0 %v547
        %1647 = vmatprep.subr.mxu0 0.0
        %1648 = vmatpush2.msra.mxu0 %v578
        %1649 = vmatprep.subr.mxu0 0.0
        %1650 = vmatpush2.msra.mxu0 %v577
        %1651 = vmatprep.subr.mxu0 0.0
        %1652 = vmatpush2.msra.mxu0 %v576
        %1653 = vmatprep.subr.mxu0 0.0
        %1654 = vmatpush2.msra.mxu0 %v575
        %1655 = vmatprep.subr.mxu0 0.0
        %1656 = vmatpush2.msra.mxu0 %v574
        %1657 = vmatprep.subr.mxu0 0.0
        %1658 = vmatpush2.msra.mxu0 %v573
        %1659 = vmatprep.subr.mxu0 0.0
        %1660 = vmatpush2.msra.mxu0 %v572
        %1661 = vmatprep.subr.mxu0 0.0
        %1662 = vmatpush2.msra.mxu0 %v571
        %1663 = vmatprep.subr.mxu0 0.0
        %1664 = vmatpush2.msra.mxu0 %v570
        %1665 = vmatprep.subr.mxu0 0.0
        %1666 = vmatpush2.msra.mxu0 %v569
        %1667 = vmatprep.subr.mxu0 0.0
        %1668 = vmatpush2.msra.mxu0 %v568
        %1669 = vmatprep.subr.mxu0 0.0
        %1670 = vmatpush2.msra.mxu0 %v567
        %1671 = vmatprep.subr.mxu0 0.0
        %1672 = vmatpush2.msra.mxu0 %v566
        %1673 = vmatprep.subr.mxu0 0.0
        %1674 = vmatpush2.msra.mxu0 %v565
        %1675 = vmatprep.subr.mxu0 0.0
        %1676 = vmatpush2.msra.mxu0 %v564
        %1677 = vmatprep.subr.mxu0 0.0
        %1678 = vmatpush2.msra.mxu0 %v563
        %1679 = vmatprep.mubr.f32.mxu0 %v847
        %1680 = vmatmul.mubr.f32.gmra.mxu0 %v839
        %v1681 = vpop.f32.mrf.mxu0
        %v1682 = vadd.f32 %v1612, %v1681
        %v1683 = vpop.f32.mrf.mxu0
        %1684 = vdwg.mxu0
        %1685 = vmatprep.subr.mxu0 0.0
        %1686 = vmatpush1.msra.mxu0 %v594
        %1687 = vmatprep.subr.mxu0 0.0
        %1688 = vmatpush1.msra.mxu0 %v593
        %1689 = vmatprep.subr.mxu0 0.0
        %1690 = vmatpush1.msra.mxu0 %v592
        %1691 = vmatprep.subr.mxu0 0.0
        %1692 = vmatpush1.msra.mxu0 %v591
        %1693 = vmatprep.subr.mxu0 0.0
        %1694 = vmatpush1.msra.mxu0 %v590
        %1695 = vmatprep.subr.mxu0 0.0
        %1696 = vmatpush1.msra.mxu0 %v589
        %1697 = vmatprep.subr.mxu0 0.0
        %1698 = vmatpush1.msra.mxu0 %v588
        %1699 = vmatprep.subr.mxu0 0.0
        %1700 = vmatpush1.msra.mxu0 %v587
        %1701 = vmatprep.subr.mxu0 0.0
        %1702 = vmatpush1.msra.mxu0 %v586
        %1703 = vmatprep.subr.mxu0 0.0
        %1704 = vmatpush1.msra.mxu0 %v585
        %1705 = vmatprep.subr.mxu0 0.0
        %1706 = vmatpush1.msra.mxu0 %v584
        %1707 = vmatprep.subr.mxu0 0.0
        %1708 = vmatpush1.msra.mxu0 %v583
        %1709 = vmatprep.subr.mxu0 0.0
        %1710 = vmatpush1.msra.mxu0 %v582
        %1711 = vmatprep.subr.mxu0 0.0
        %1712 = vmatpush1.msra.mxu0 %v581
        %1713 = vmatprep.subr.mxu0 0.0
        %1714 = vmatpush1.msra.mxu0 %v580
        %1715 = vmatprep.subr.mxu0 0.0
        %1716 = vmatpush1.msra.mxu0 %v579
        %1717 = vmatprep.subr.mxu0 0.0
        %1718 = vmatpush2.msra.mxu0 %v610
        %1719 = vmatprep.subr.mxu0 0.0
        %1720 = vmatpush2.msra.mxu0 %v609
        %1721 = vmatprep.subr.mxu0 0.0
        %1722 = vmatpush2.msra.mxu0 %v608
        %1723 = vmatprep.subr.mxu0 0.0
        %1724 = vmatpush2.msra.mxu0 %v607
        %1725 = vmatprep.subr.mxu0 0.0
        %1726 = vmatpush2.msra.mxu0 %v606
        %1727 = vmatprep.subr.mxu0 0.0
        %1728 = vmatpush2.msra.mxu0 %v605
        %1729 = vmatprep.subr.mxu0 0.0
        %1730 = vmatpush2.msra.mxu0 %v604
        %1731 = vmatprep.subr.mxu0 0.0
        %1732 = vmatpush2.msra.mxu0 %v603
        %1733 = vmatprep.subr.mxu0 0.0
        %1734 = vmatpush2.msra.mxu0 %v602
        %1735 = vmatprep.subr.mxu0 0.0
        %1736 = vmatpush2.msra.mxu0 %v601
        %1737 = vmatprep.subr.mxu0 0.0
        %1738 = vmatpush2.msra.mxu0 %v600
        %1739 = vmatprep.subr.mxu0 0.0
        %1740 = vmatpush2.msra.mxu0 %v599
        %1741 = vmatprep.subr.mxu0 0.0
        %1742 = vmatpush2.msra.mxu0 %v598
        %1743 = vmatprep.subr.mxu0 0.0
        %1744 = vmatpush2.msra.mxu0 %v597
        %1745 = vmatprep.subr.mxu0 0.0
        %1746 = vmatpush2.msra.mxu0 %v596
        %1747 = vmatprep.subr.mxu0 0.0
        %1748 = vmatpush2.msra.mxu0 %v595
        %1749 = vmatprep.mubr.f32.mxu0 %v848
        %1750 = vmatmul.mubr.f32.gmra.mxu0 %v846
        %v1751 = vpop.f32.mrf.mxu0
        %v1752 = vadd.f32 %v1682, %v1751
        %v1753 = vpop.f32.mrf.mxu0
        %1754 = vdwg.mxu0
        %1755 = vmatprep.subr.mxu0 0.0
        %1756 = vmatpush1.msra.mxu0 %v626
        %1757 = vmatprep.subr.mxu0 0.0
        %1758 = vmatpush1.msra.mxu0 %v625
        %1759 = vmatprep.subr.mxu0 0.0
        %1760 = vmatpush1.msra.mxu0 %v624
        %1761 = vmatprep.subr.mxu0 0.0
        %1762 = vmatpush1.msra.mxu0 %v623
        %1763 = vmatprep.subr.mxu0 0.0
        %1764 = vmatpush1.msra.mxu0 %v622
        %1765 = vmatprep.subr.mxu0 0.0
        %1766 = vmatpush1.msra.mxu0 %v621
        %1767 = vmatprep.subr.mxu0 0.0
        %1768 = vmatpush1.msra.mxu0 %v620
        %1769 = vmatprep.subr.mxu0 0.0
        %1770 = vmatpush1.msra.mxu0 %v619
        %1771 = vmatprep.subr.mxu0 0.0
        %1772 = vmatpush1.msra.mxu0 %v618
        %1773 = vmatprep.subr.mxu0 0.0
        %1774 = vmatpush1.msra.mxu0 %v617
        %1775 = vmatprep.subr.mxu0 0.0
        %1776 = vmatpush1.msra.mxu0 %v616
        %1777 = vmatprep.subr.mxu0 0.0
        %1778 = vmatpush1.msra.mxu0 %v615
        %1779 = vmatprep.subr.mxu0 0.0
        %1780 = vmatpush1.msra.mxu0 %v614
        %1781 = vmatprep.subr.mxu0 0.0
        %1782 = vmatpush1.msra.mxu0 %v613
        %1783 = vmatprep.subr.mxu0 0.0
        %1784 = vmatpush1.msra.mxu0 %v612
        %1785 = vmatprep.subr.mxu0 0.0
        %1786 = vmatpush1.msra.mxu0 %v611
        %1787 = vmatprep.subr.mxu0 0.0
        %1788 = vmatpush2.msra.mxu0 %v642
        %1789 = vmatprep.subr.mxu0 0.0
        %1790 = vmatpush2.msra.mxu0 %v641
        %1791 = vmatprep.subr.mxu0 0.0
        %1792 = vmatpush2.msra.mxu0 %v640
        %1793 = vmatprep.subr.mxu0 0.0
        %1794 = vmatpush2.msra.mxu0 %v639
        %1795 = vmatprep.subr.mxu0 0.0
        %1796 = vmatpush2.msra.mxu0 %v638
        %1797 = vmatprep.subr.mxu0 0.0
        %1798 = vmatpush2.msra.mxu0 %v637
        %1799 = vmatprep.subr.mxu0 0.0
        %1800 = vmatpush2.msra.mxu0 %v636
        %1801 = vmatprep.subr.mxu0 0.0
        %1802 = vmatpush2.msra.mxu0 %v635
        %1803 = vmatprep.subr.mxu0 0.0
        %1804 = vmatpush2.msra.mxu0 %v634
        %1805 = vmatprep.subr.mxu0 0.0
        %1806 = vmatpush2.msra.mxu0 %v633
        %1807 = vmatprep.subr.mxu0 0.0
        %1808 = vmatpush2.msra.mxu0 %v632
        %1809 = vmatprep.subr.mxu0 0.0
        %1810 = vmatpush2.msra.mxu0 %v631
        %1811 = vmatprep.subr.mxu0 0.0
        %1812 = vmatpush2.msra.mxu0 %v630
        %1813 = vmatprep.subr.mxu0 0.0
        %1814 = vmatpush2.msra.mxu0 %v629
        %1815 = vmatprep.subr.mxu0 0.0
        %1816 = vmatpush2.msra.mxu0 %v628
        %1817 = vmatprep.subr.mxu0 0.0
        %1818 = vmatpush2.msra.mxu0 %v627
        %1819 = vmatprep.mubr.f32.mxu0 %v864
        %1820 = vmatmul.mubr.f32.gmra.mxu0 %v856
        %v1821 = vpop.f32.mrf.mxu0
        %v1822 = vadd.f32 %v1752, %v1821
        %v1823 = vpop.f32.mrf.mxu0
        %1824 = vdwg.mxu0
        %1825 = vmatprep.subr.mxu0 0.0
        %1826 = vmatpush1.msra.mxu0 %v658
        %1827 = vmatprep.subr.mxu0 0.0
        %1828 = vmatpush1.msra.mxu0 %v657
        %1829 = vmatprep.subr.mxu0 0.0
        %1830 = vmatpush1.msra.mxu0 %v656
        %1831 = vmatprep.subr.mxu0 0.0
        %1832 = vmatpush1.msra.mxu0 %v655
        %1833 = vmatprep.subr.mxu0 0.0
        %1834 = vmatpush1.msra.mxu0 %v654
        %1835 = vmatprep.subr.mxu0 0.0
        %1836 = vmatpush1.msra.mxu0 %v653
        %1837 = vmatprep.subr.mxu0 0.0
        %1838 = vmatpush1.msra.mxu0 %v652
        %1839 = vmatprep.subr.mxu0 0.0
        %1840 = vmatpush1.msra.mxu0 %v651
        %1841 = vmatprep.subr.mxu0 0.0
        %1842 = vmatpush1.msra.mxu0 %v650
        %1843 = vmatprep.subr.mxu0 0.0
        %1844 = vmatpush1.msra.mxu0 %v649
        %1845 = vmatprep.subr.mxu0 0.0
        %1846 = vmatpush1.msra.mxu0 %v648
        %1847 = vmatprep.subr.mxu0 0.0
        %1848 = vmatpush1.msra.mxu0 %v647
        %1849 = vmatprep.subr.mxu0 0.0
        %1850 = vmatpush1.msra.mxu0 %v646
        %1851 = vmatprep.subr.mxu0 0.0
        %1852 = vmatpush1.msra.mxu0 %v645
        %1853 = vmatprep.subr.mxu0 0.0
        %1854 = vmatpush1.msra.mxu0 %v644
        %1855 = vmatprep.subr.mxu0 0.0
        %1856 = vmatpush1.msra.mxu0 %v643
        %1857 = vmatprep.subr.mxu0 0.0
        %1858 = vmatpush2.msra.mxu0 %v674
        %1859 = vmatprep.subr.mxu0 0.0
        %1860 = vmatpush2.msra.mxu0 %v673
        %1861 = vmatprep.subr.mxu0 0.0
        %1862 = vmatpush2.msra.mxu0 %v672
        %1863 = vmatprep.subr.mxu0 0.0
        %1864 = vmatpush2.msra.mxu0 %v671
        %1865 = vmatprep.subr.mxu0 0.0
        %1866 = vmatpush2.msra.mxu0 %v670
        %1867 = vmatprep.subr.mxu0 0.0
        %1868 = vmatpush2.msra.mxu0 %v669
        %1869 = vmatprep.subr.mxu0 0.0
        %1870 = vmatpush2.msra.mxu0 %v668
        %1871 = vmatprep.subr.mxu0 0.0
        %1872 = vmatpush2.msra.mxu0 %v667
        %1873 = vmatprep.subr.mxu0 0.0
        %1874 = vmatpush2.msra.mxu0 %v666
        %1875 = vmatprep.subr.mxu0 0.0
        %1876 = vmatpush2.msra.mxu0 %v665
        %1877 = vmatprep.subr.mxu0 0.0
        %1878 = vmatpush2.msra.mxu0 %v664
        %1879 = vmatprep.subr.mxu0 0.0
        %1880 = vmatpush2.msra.mxu0 %v663
        %1881 = vmatprep.subr.mxu0 0.0
        %1882 = vmatpush2.msra.mxu0 %v662
        %1883 = vmatprep.subr.mxu0 0.0
        %1884 = vmatpush2.msra.mxu0 %v661
        %1885 = vmatprep.subr.mxu0 0.0
        %1886 = vmatpush2.msra.mxu0 %v660
        %1887 = vmatprep.subr.mxu0 0.0
        %1888 = vmatpush2.msra.mxu0 %v659
        %1889 = vmatprep.mubr.f32.mxu0 %v865
        %1890 = vmatmul.mubr.f32.gmra.mxu0 %v863
        %v1891 = vpop.f32.mrf.mxu0
        %v1892 = vadd.f32 %v1822, %v1891
        %v1893 = vpop.f32.mrf.mxu0
        %1894 = vdwg.mxu0
        %1895 = vmatprep.subr.mxu0 0.0
        %1896 = vmatpush1.msra.mxu0 %v690
        %1897 = vmatprep.subr.mxu0 0.0
        %1898 = vmatpush1.msra.mxu0 %v689
        %1899 = vmatprep.subr.mxu0 0.0
        %1900 = vmatpush1.msra.mxu0 %v688
        %1901 = vmatprep.subr.mxu0 0.0
        %1902 = vmatpush1.msra.mxu0 %v687
        %1903 = vmatprep.subr.mxu0 0.0
        %1904 = vmatpush1.msra.mxu0 %v686
        %1905 = vmatprep.subr.mxu0 0.0
        %1906 = vmatpush1.msra.mxu0 %v685
        %1907 = vmatprep.subr.mxu0 0.0
        %1908 = vmatpush1.msra.mxu0 %v684
        %1909 = vmatprep.subr.mxu0 0.0
        %1910 = vmatpush1.msra.mxu0 %v683
        %1911 = vmatprep.subr.mxu0 0.0
        %1912 = vmatpush1.msra.mxu0 %v682
        %1913 = vmatprep.subr.mxu0 0.0
        %1914 = vmatpush1.msra.mxu0 %v681
        %1915 = vmatprep.subr.mxu0 0.0
        %1916 = vmatpush1.msra.mxu0 %v680
        %1917 = vmatprep.subr.mxu0 0.0
        %1918 = vmatpush1.msra.mxu0 %v679
        %1919 = vmatprep.subr.mxu0 0.0
        %1920 = vmatpush1.msra.mxu0 %v678
        %1921 = vmatprep.subr.mxu0 0.0
        %1922 = vmatpush1.msra.mxu0 %v677
        %1923 = vmatprep.subr.mxu0 0.0
        %1924 = vmatpush1.msra.mxu0 %v676
        %1925 = vmatprep.subr.mxu0 0.0
        %1926 = vmatpush1.msra.mxu0 %v675
        %1927 = vmatprep.subr.mxu0 0.0
        %1928 = vmatpush2.msra.mxu0 %v706
        %1929 = vmatprep.subr.mxu0 0.0
        %1930 = vmatpush2.msra.mxu0 %v705
        %1931 = vmatprep.subr.mxu0 0.0
        %1932 = vmatpush2.msra.mxu0 %v704
        %1933 = vmatprep.subr.mxu0 0.0
        %1934 = vmatpush2.msra.mxu0 %v703
        %1935 = vmatprep.subr.mxu0 0.0
        %1936 = vmatpush2.msra.mxu0 %v702
        %1937 = vmatprep.subr.mxu0 0.0
        %1938 = vmatpush2.msra.mxu0 %v701
        %1939 = vmatprep.subr.mxu0 0.0
        %1940 = vmatpush2.msra.mxu0 %v700
        %1941 = vmatprep.subr.mxu0 0.0
        %1942 = vmatpush2.msra.mxu0 %v699
        %1943 = vmatprep.subr.mxu0 0.0
        %1944 = vmatpush2.msra.mxu0 %v698
        %1945 = vmatprep.subr.mxu0 0.0
        %1946 = vmatpush2.msra.mxu0 %v697
        %1947 = vmatprep.subr.mxu0 0.0
        %1948 = vmatpush2.msra.mxu0 %v696
        %1949 = vmatprep.subr.mxu0 0.0
        %1950 = vmatpush2.msra.mxu0 %v695
        %1951 = vmatprep.subr.mxu0 0.0
        %1952 = vmatpush2.msra.mxu0 %v694
        %1953 = vmatprep.subr.mxu0 0.0
        %1954 = vmatpush2.msra.mxu0 %v693
        %1955 = vmatprep.subr.mxu0 0.0
        %1956 = vmatpush2.msra.mxu0 %v692
        %1957 = vmatprep.subr.mxu0 0.0
        %1958 = vmatpush2.msra.mxu0 %v691
        %1959 = vmatprep.mubr.f32.mxu0 %v881
        %1960 = vmatmul.mubr.f32.gmra.mxu0 %v873
        %v1961 = vpop.f32.mrf.mxu0
        %v1962 = vadd.f32 %v1892, %v1961
        %v1963 = vpop.f32.mrf.mxu0
        %1964 = vdwg.mxu0
        %1965 = vmatprep.subr.mxu0 0.0
        %1966 = vmatpush1.msra.mxu0 %v722
        %1967 = vmatprep.subr.mxu0 0.0
        %1968 = vmatpush1.msra.mxu0 %v721
        %1969 = vmatprep.subr.mxu0 0.0
        %1970 = vmatpush1.msra.mxu0 %v720
        %1971 = vmatprep.subr.mxu0 0.0
        %1972 = vmatpush1.msra.mxu0 %v719
        %1973 = vmatprep.subr.mxu0 0.0
        %1974 = vmatpush1.msra.mxu0 %v718
        %1975 = vmatprep.subr.mxu0 0.0
        %1976 = vmatpush1.msra.mxu0 %v717
        %1977 = vmatprep.subr.mxu0 0.0
        %1978 = vmatpush1.msra.mxu0 %v716
        %1979 = vmatprep.subr.mxu0 0.0
        %1980 = vmatpush1.msra.mxu0 %v715
        %1981 = vmatprep.subr.mxu0 0.0
        %1982 = vmatpush1.msra.mxu0 %v714
        %1983 = vmatprep.subr.mxu0 0.0
        %1984 = vmatpush1.msra.mxu0 %v713
        %1985 = vmatprep.subr.mxu0 0.0
        %1986 = vmatpush1.msra.mxu0 %v712
        %1987 = vmatprep.subr.mxu0 0.0
        %1988 = vmatpush1.msra.mxu0 %v711
        %1989 = vmatprep.subr.mxu0 0.0
        %1990 = vmatpush1.msra.mxu0 %v710
        %1991 = vmatprep.subr.mxu0 0.0
        %1992 = vmatpush1.msra.mxu0 %v709
        %1993 = vmatprep.subr.mxu0 0.0
        %1994 = vmatpush1.msra.mxu0 %v708
        %1995 = vmatprep.subr.mxu0 0.0
        %1996 = vmatpush1.msra.mxu0 %v707
        %1997 = vmatprep.subr.mxu0 0.0
        %1998 = vmatpush2.msra.mxu0 %v738
        %1999 = vmatprep.subr.mxu0 0.0
        %2000 = vmatpush2.msra.mxu0 %v737
        %2001 = vmatprep.subr.mxu0 0.0
        %2002 = vmatpush2.msra.mxu0 %v736
        %2003 = vmatprep.subr.mxu0 0.0
        %2004 = vmatpush2.msra.mxu0 %v735
        %2005 = vmatprep.subr.mxu0 0.0
        %2006 = vmatpush2.msra.mxu0 %v734
        %2007 = vmatprep.subr.mxu0 0.0
        %2008 = vmatpush2.msra.mxu0 %v733
        %2009 = vmatprep.subr.mxu0 0.0
        %2010 = vmatpush2.msra.mxu0 %v732
        %2011 = vmatprep.subr.mxu0 0.0
        %2012 = vmatpush2.msra.mxu0 %v731
        %2013 = vmatprep.subr.mxu0 0.0
        %2014 = vmatpush2.msra.mxu0 %v730
        %2015 = vmatprep.subr.mxu0 0.0
        %2016 = vmatpush2.msra.mxu0 %v729
        %2017 = vmatprep.subr.mxu0 0.0
        %2018 = vmatpush2.msra.mxu0 %v728
        %2019 = vmatprep.subr.mxu0 0.0
        %2020 = vmatpush2.msra.mxu0 %v727
        %2021 = vmatprep.subr.mxu0 0.0
        %2022 = vmatpush2.msra.mxu0 %v726
        %2023 = vmatprep.subr.mxu0 0.0
        %2024 = vmatpush2.msra.mxu0 %v725
        %2025 = vmatprep.subr.mxu0 0.0
        %2026 = vmatpush2.msra.mxu0 %v724
        %2027 = vmatprep.subr.mxu0 0.0
        %2028 = vmatpush2.msra.mxu0 %v723
        %2029 = vmatprep.mubr.f32.mxu0 %v882
        %2030 = vmatmul.mubr.f32.gmra.mxu0 %v880
        %v2031 = vpop.f32.mrf.mxu0
        %v2032 = vadd.f32 %v1962, %v2031
        %v2033 = vpop.f32.mrf.mxu0
        %2034 = vdwg.mxu0
        %v2035 = vadd.f32 %v218, %v2032
        %vm2036 = vcmask 9216
        %2037 = vst.msk [vmem:[#allocation2] sm:$0x3] %vm2036, %v2035
        %p2038 = scmp.eq.s32.totalorder %s20, 4
        // Predicated region
        $region37: #{tpu_custom_call.1} parent=31 // pred_check
          %p2039 = pneg %p2038
        $region38: #{tpu_custom_call.1} parent=31 // pred_check_branch
          %2041 = sbr.rel (%p2039) target = $region40
        $region39: #{tpu_custom_call.1} parent=31 // pred_region
          %v2042 = vld [vmem:[#allocation2] sm:$0x3]
          %v2043 = vld [vmem:[%s2] sm:$0x1]
          %v2045 = vlaneseq
          %v2046 = vshrl.u32 %v2045, 7
          %v2047 = vsub.s32 0, %v2046
          %v2048 = vrot.slane %v2043, %v2047
          %v2050 = vadd.f32 %v2042, %v2048
          %v2051 = vsel %vm2036, %v2050, -inf
          %2052 = vmax.xlane.f32.xlu0 %v2051
          %v2053 = vpop.xlane.xlu0 %2052
          %v2054 = vsub.f32 %v2050, %v2053
          %v2055 = vmul.f32 %v2054, 1.442695
          %v2056 = vpow.pop %v2055
          %v2057 = vsel %vm2036, %v2056, 0.0
          %2058 = vadd.xlane.f32.xlu0 %v2057
          %v2059 = vpop.xlane.xlu0 %2058
          %v2060 = vrcp.pop %v2059
          %v2061 = vmul.f32 %v2056, %v2060
          %2062 = vst.msk [vmem:[#allocation3] sm:$0x3] %vm2036, %v2061
        $region40: #{tpu_custom_call.1} parent=31 // pred_fallthru
          _
        // Predicated region
        $region41: #{tpu_custom_call.1} parent=31 // pred_check
          %p2063 = pneg %p120
        $region42: #{tpu_custom_call.1} parent=31 // pred_check_branch
          %2065 = sbr.rel (%p2063) target = $region44
        $region43: #{tpu_custom_call.1} parent=31 // pred_region
          %s2067 = ssub.s32 32, 32
          %2068 = vsyncadd [#allocation4], %s2067
          %s2069 = smul.addr %s19, 32
          %s2070 = scalar_lea.hbm %s3, %s2069
          %s2072 = sshll.u32 [#allocation3], 4
          %s2073 = int_to_ptr.vmem [resolvable:$true] %s2072
          %2075 = dma.vmem_to_hbm [thread:$0]  %s2073, 32, %s2070, [#allocation4]
        $region44: #{tpu_custom_call.1} parent=31 // pred_fallthru
          _
        // Predicated region
        $region45: #{tpu_custom_call.1} parent=31 // pred_check
          %p2076 = pneg %p120
        $region46: #{tpu_custom_call.1} parent=31 // pred_check_branch
          %2078 = sbr.rel (%p2076) target = $region48
        $region47: #{tpu_custom_call.1} parent=31 // pred_region
          %2079 = dma.done [#allocation4], 32
        $region48: #{tpu_custom_call.1} parent=31 // pred_fallthru
          _
      $region32: #{tpu_custom_call.1} parent=5 // pred_fallthru
        _
      %p2080 = scmp.le.s32.totalorder 2, %s10
      // Predicated region
      $region49: #{tpu_custom_call.1} parent=5 // pred_check
        %p2081 = pneg %p2080
      $region50: #{tpu_custom_call.1} parent=5 // pred_check_branch
        %2083 = sbr.rel (%p2081) target = $region52
      $region51: #{tpu_custom_call.1} parent=5 // pred_region
        %s2084 = ssub.s32 %s10, 2
      $region52: #{tpu_custom_call.1} parent=5 // pred_fallthru
        _
    $region6: #{tpu_custom_call.1} parent=1 // loop_footer
      %s14 = sadd.s32 1, %s10
    $region7: #{tpu_custom_call.1} parent=1 // loop_footer_branch
      %9 = sbr.rel target = $region3
    $region8: #{tpu_custom_call.1} parent=1 // loop_exit
      _
    %2085 = vsyncpa [#allocation4], 1
    %s2086 = scalar_lea.sflag [#allocation4], 1
    %2087 = vsyncpa %s2086, 1

</llo_original>
